<compile_context>
chip_gen: v6e
topology: v6e:2x2x1
jax: 0.10.0
libtpu: 0.0.40
codegen_flags: <defaults>
</compile_context>

<pallas_src>
from math import sqrt

import jax
import jax.numpy as jnp
from jax.experimental import pallas as pl
from jax.experimental.pallas import tpu as pltpu


def _attention_kernel(q_ref, k_ref, v_ref,
                      wq_ref, bq_ref,
                      wk_ref, bk_ref,
                      wv_ref, bv_ref,
                      wo_ref, bo_ref,
                      out_ref):
    """One (batch, L-tile) grid step.

    Shapes seen by the kernel:
      q_ref            : (1, TL, d_model)
      k_ref / v_ref    : (1, S,  d_model)
      wq_ref / wk_ref  : (H, d_model, dk)   bf16
      wv_ref           : (H, d_model, dv)   bf16
      wo_ref           : (H, dv, d_model)   bf16
      bq_ref / bk_ref  : (H, 1, dk)         f32
      bv_ref           : (H, 1, dv)         f32
      bo_ref           : (1, d_model)       f32
      out_ref          : (1, TL, d_model)
    """
    H = wq_ref.shape[0]
    TL = q_ref.shape[1]
    d_model = out_ref.shape[2]

    # bf16 operands for the MXU; all accumulation in f32.
    q = q_ref[0].astype(jnp.bfloat16)   # (TL, d_model)
    k = k_ref[0].astype(jnp.bfloat16)   # (S,  d_model)
    v = v_ref[0].astype(jnp.bfloat16)   # (S,  d_model)

    contract_last = (((1,), (1,)), ((), ()))
    acc = jnp.zeros((TL, d_model), jnp.float32)

    # Static unroll over heads; leading-axis weight indexing is free.
    for h in range(H):
        # Projections (1/sqrt(dk) already folded into wq/bq host-side).
        qh = jnp.dot(q, wq_ref[h], preferred_element_type=jnp.float32) + bq_ref[h]  # (TL, dk)
        kh = jnp.dot(k, wk_ref[h], preferred_element_type=jnp.float32) + bk_ref[h]  # (S,  dk)
        vh = jnp.dot(v, wv_ref[h], preferred_element_type=jnp.float32) + bv_ref[h]  # (S,  dv)

        # Scores: contract last axes of Q_h and K_h directly (no transpose).
        s = jax.lax.dot_general(qh.astype(jnp.bfloat16), kh.astype(jnp.bfloat16),
                                dimension_numbers=contract_last,
                                preferred_element_type=jnp.float32)                 # (TL, S)

        # Softmax in f32; reciprocal on the EUP.
        m = jnp.max(s, axis=-1, keepdims=True)
        p = jnp.exp(s - m)
        a = p * pl.reciprocal(jnp.sum(p, axis=-1, keepdims=True), approx=True)

        # A @ V, then per-head output projection fused into the accumulator
        # (no (TL, H*dv) context, no concatenate).
        ov = jnp.dot(a.astype(jnp.bfloat16), vh.astype(jnp.bfloat16),
                     preferred_element_type=jnp.float32)                            # (TL, dv)
        acc = acc + jnp.dot(ov.astype(jnp.bfloat16), wo_ref[h],
                            preferred_element_type=jnp.float32)                     # (TL, d_model)

    out_ref[0] = (acc + bo_ref[...]).astype(out_ref.dtype)


def attention_layer(queries, keys, values, params, *, n_heads, q_tile=128):
    """Pallas implementation of AttentionLayer.forward (attn_mask = None)."""
    B, L, d_model = queries.shape
    _, S, _ = keys.shape
    wq, bq, wk, bk, wv, bv, wo, bo = params
    H = n_heads
    d_keys = wq.shape[1] // H
    d_values = wv.shape[1] // H

    # ---- host-side parameter prep ------------------------------------------
    # Fold the attention scale into the Q projection.
    scale = 1.0 / sqrt(d_keys)
    wq_s = wq * scale
    bq_s = bq * scale

    # Leading-axis head layout; bf16 weights for the MXU, f32 biases.
    def to_heads_in(w, dh):
        return jnp.transpose(w.reshape(d_model, H, dh), (1, 0, 2)).astype(jnp.bfloat16)

    wq_h = to_heads_in(wq_s, d_keys)                                 # (H, d_model, dk)
    wk_h = to_heads_in(wk, d_keys)                                   # (H, d_model, dk)
    wv_h = to_heads_in(wv, d_values)                                 # (H, d_model, dv)
    wo_h = wo.reshape(H, d_values, d_model).astype(jnp.bfloat16)     # (H, dv, d_model)

    bq_h = bq_s.reshape(H, 1, d_keys).astype(jnp.float32)
    bk_h = bk.reshape(H, 1, d_keys).astype(jnp.float32)
    bv_h = bv.reshape(H, 1, d_values).astype(jnp.float32)
    bo_2 = bo.reshape(1, d_model).astype(jnp.float32)

    # ---- query-length tiling -------------------------------------------------
    # TL must be a multiple of 8 (f32 sublane) or equal to L.
    if L % q_tile == 0 and q_tile % 8 == 0:
        TL = q_tile
    else:
        TL = L
    grid = (B, L // TL)

    const3 = lambda arr: pl.BlockSpec(arr.shape, lambda b, l: (0, 0, 0))
    const2 = lambda arr: pl.BlockSpec(arr.shape, lambda b, l: (0, 0))

    grid_spec = pltpu.PrefetchScalarGridSpec(
        num_scalar_prefetch=0,
        grid=grid,
        in_specs=[
            pl.BlockSpec((1, TL, d_model), lambda b, l: (b, l, 0)),   # queries (tiled)
            pl.BlockSpec((1, S, d_model), lambda b, l: (b, 0, 0)),    # keys (full S)
            pl.BlockSpec((1, S, d_model), lambda b, l: (b, 0, 0)),    # values (full S)
            const3(wq_h), const3(bq_h),
            const3(wk_h), const3(bk_h),
            const3(wv_h), const3(bv_h),
            const3(wo_h), const2(bo_2),
        ],
        out_specs=pl.BlockSpec((1, TL, d_model), lambda b, l: (b, l, 0)),
    )

    return pl.pallas_call(
        _attention_kernel,
        out_shape=jax.ShapeDtypeStruct((B, L, d_model), queries.dtype),
        grid_spec=grid_spec,
        compiler_params=pltpu.CompilerParams(
            dimension_semantics=("parallel", "parallel"),
            vmem_limit_bytes=32 * 1024 * 1024,
        ),
    )(queries, keys, values,
      wq_h, bq_h, wk_h, bk_h, wv_h, bv_h, wo_h, bo_2)


def _reference(queries, keys, values, params, *, n_heads):
    """Plain-JAX f32 reference mirroring the PyTorch forward (no mask)."""
    wq, bq, wk, bk, wv, bv, wo, bo = params
    B, L, _ = queries.shape
    _, S, _ = keys.shape
    H = n_heads
    Q = (queries @ wq + bq).reshape(B, L, H, -1)
    K = (keys @ wk + bk).reshape(B, S, H, -1)
    V = (values @ wv + bv).reshape(B, S, H, -1)
    E = Q.shape[-1]
    scores = jnp.einsum("blhe,bshe->bhls", Q, K) / sqrt(E)
    A = jax.nn.softmax(scores, axis=-1)
    out = jnp.einsum("bhls,bshd->blhd", A, V).reshape(B, L, -1)
    return out @ wo + bo


if __name__ == "__main__":
    # Small deterministic config (L tiled into 2 blocks so the L-grid is exercised).
    B, L, S = 2, 16, 16
    d_model, n_heads = 32, 4
    d_keys = d_values = d_model // n_heads

    key = jax.random.PRNGKey(0)
    ks = jax.random.split(key, 11)

    queries = jax.random.normal(ks[0], (B, L, d_model), jnp.float32)
    keys_in = jax.random.normal(ks[1], (B, S, d_model), jnp.float32)
    values = jax.random.normal(ks[2], (B, S, d_model), jnp.float32)

    def init_linear(kw, kb, fan_in, fan_out):
        bound = 1.0 / sqrt(fan_in)
        w = jax.random.uniform(kw, (fan_in, fan_out), jnp.float32, -bound, bound)
        b = jax.random.uniform(kb, (fan_out,), jnp.float32, -bound, bound)
        return w, b

    wq, bq = init_linear(ks[3], ks[4], d_model, d_keys * n_heads)
    wk, bk = init_linear(ks[5], ks[6], d_model, d_keys * n_heads)
    wv, bv = init_linear(ks[7], ks[8], d_model, d_values * n_heads)
    wo, bo = init_linear(ks[9], ks[10], d_values * n_heads, d_model)
    params = (wq, bq, wk, bk, wv, bv, wo, bo)

    out = attention_layer(queries, keys_in, values, params,
                          n_heads=n_heads, q_tile=8)   # grid = (B, L//8) = (2, 2)
    out = jax.block_until_ready(out)

    ref = _reference(queries, keys_in, values, params, n_heads=n_heads)
    assert out.shape == (B, L, d_model)
    max_err = float(jnp.max(jnp.abs(out - ref)))
    # bf16 MXU operands -> loosened tolerance (softmax stats kept in f32).
    assert jnp.allclose(out, ref, atol=5e-2, rtol=5e-2), \
        f"mismatch vs reference (max abs err {max_err})"

    print("KERNEL_OK")
</pallas_src>

<mosaic_0001>
module attributes {stable_mosaic.version = 11 : i64} {
  func.func @_attention_kernel(%arg0: i32, %arg1: i32, %arg2: memref<1x8x32xf32, #tpu.memory_space<vmem>>, %arg3: memref<1x16x32xf32, #tpu.memory_space<vmem>>, %arg4: memref<1x16x32xf32, #tpu.memory_space<vmem>>, %arg5: memref<4x32x8xbf16, #tpu.memory_space<vmem>>, %arg6: memref<4x1x8xf32, #tpu.memory_space<vmem>>, %arg7: memref<4x32x8xbf16, #tpu.memory_space<vmem>>, %arg8: memref<4x1x8xf32, #tpu.memory_space<vmem>>, %arg9: memref<4x32x8xbf16, #tpu.memory_space<vmem>>, %arg10: memref<4x1x8xf32, #tpu.memory_space<vmem>>, %arg11: memref<4x8x32xbf16, #tpu.memory_space<vmem>>, %arg12: memref<1x32xf32, #tpu.memory_space<vmem>>, %arg13: memref<1x8x32xf32, #tpu.memory_space<vmem>>) attributes {dimension_semantics = [#tpu.dimension_semantics<parallel>, #tpu.dimension_semantics<parallel>], iteration_bounds = array<i64: 2, 2>, scalar_prefetch = 0 : i64, scratch_operands = 0 : i64, tpu.core_type = #tpu.core_type<tc>, window_params = [{transform_indices = @transform_0, window_bounds = array<i64: 1, 8, 32>}, {transform_indices = @transform_1, window_bounds = array<i64: 1, 16, 32>}, {transform_indices = @transform_2, window_bounds = array<i64: 1, 16, 32>}, {pipeline_mode = #tpu.pipeline_mode<synchronous>, transform_indices = @transform_3, window_bounds = array<i64: 4, 32, 8>}, {pipeline_mode = #tpu.pipeline_mode<synchronous>, transform_indices = @transform_4, window_bounds = array<i64: 4, 1, 8>}, {pipeline_mode = #tpu.pipeline_mode<synchronous>, transform_indices = @transform_5, window_bounds = array<i64: 4, 32, 8>}, {pipeline_mode = #tpu.pipeline_mode<synchronous>, transform_indices = @transform_6, window_bounds = array<i64: 4, 1, 8>}, {pipeline_mode = #tpu.pipeline_mode<synchronous>, transform_indices = @transform_7, window_bounds = array<i64: 4, 32, 8>}, {pipeline_mode = #tpu.pipeline_mode<synchronous>, transform_indices = @transform_8, window_bounds = array<i64: 4, 1, 8>}, {pipeline_mode = #tpu.pipeline_mode<synchronous>, transform_indices = @transform_9, window_bounds = array<i64: 4, 8, 32>}, {pipeline_mode = #tpu.pipeline_mode<synchronous>, transform_indices = @transform_10, window_bounds = array<i64: 1, 32>}, {transform_indices = @transform_11, window_bounds = array<i64: 1, 8, 32>}]} {
    %c0 = arith.constant 0 : index
    %c0_0 = arith.constant 0 : index
    %c0_1 = arith.constant 0 : index
    %0 = vector.load %arg2[%c0, %c0_0, %c0_1] : memref<1x8x32xf32, #tpu.memory_space<vmem>>, vector<1x8x32xf32>
    %1 = vector.shape_cast %0 : vector<1x8x32xf32> to vector<8x32xf32>
    %2 = arith.truncf %1 : vector<8x32xf32> to vector<8x32xbf16>
    %c0_2 = arith.constant 0 : index
    %c0_3 = arith.constant 0 : index
    %c0_4 = arith.constant 0 : index
    %3 = vector.load %arg3[%c0_2, %c0_3, %c0_4] : memref<1x16x32xf32, #tpu.memory_space<vmem>>, vector<1x16x32xf32>
    %4 = vector.shape_cast %3 : vector<1x16x32xf32> to vector<16x32xf32>
    %5 = arith.truncf %4 : vector<16x32xf32> to vector<16x32xbf16>
    %c0_5 = arith.constant 0 : index
    %c0_6 = arith.constant 0 : index
    %c0_7 = arith.constant 0 : index
    %6 = vector.load %arg4[%c0_5, %c0_6, %c0_7] : memref<1x16x32xf32, #tpu.memory_space<vmem>>, vector<1x16x32xf32>
    %7 = vector.shape_cast %6 : vector<1x16x32xf32> to vector<16x32xf32>
    %8 = arith.truncf %7 : vector<16x32xf32> to vector<16x32xbf16>
    %cst = arith.constant 0.000000e+00 : f32
    %9 = vector.broadcast %cst : f32 to vector<8x32xf32>
    %c0_8 = arith.constant 0 : index
    %c0_9 = arith.constant 0 : index
    %c0_10 = arith.constant 0 : index
    %10 = vector.load %arg5[%c0_8, %c0_9, %c0_10] : memref<4x32x8xbf16, #tpu.memory_space<vmem>>, vector<1x32x8xbf16>
    %11 = vector.shape_cast %10 : vector<1x32x8xbf16> to vector<32x8xbf16>
    %cst_11 = arith.constant dense<0.000000e+00> : vector<8x8xf32>
    %12 = tpu.matmul %2, %11, %cst_11 {dimension_numbers = #tpu.dot_dimension_numbers<[1], [0], [0], [1], [0, 0, 1, 1], [], []>} : vector<8x32xbf16>, vector<32x8xbf16>, vector<8x8xf32> -> vector<8x8xf32>
    %c0_12 = arith.constant 0 : index
    %c0_13 = arith.constant 0 : index
    %c0_14 = arith.constant 0 : index
    %13 = vector.load %arg6[%c0_12, %c0_13, %c0_14] : memref<4x1x8xf32, #tpu.memory_space<vmem>>, vector<1x1x8xf32>
    %14 = vector.shape_cast %13 : vector<1x1x8xf32> to vector<1x8xf32>
    %15 = vector.broadcast %14 : vector<1x8xf32> to vector<8x8xf32>
    %16 = arith.addf %12, %15 : vector<8x8xf32>
    %c0_15 = arith.constant 0 : index
    %c0_16 = arith.constant 0 : index
    %c0_17 = arith.constant 0 : index
    %17 = vector.load %arg7[%c0_15, %c0_16, %c0_17] : memref<4x32x8xbf16, #tpu.memory_space<vmem>>, vector<1x32x8xbf16>
    %18 = vector.shape_cast %17 : vector<1x32x8xbf16> to vector<32x8xbf16>
    %cst_18 = arith.constant dense<0.000000e+00> : vector<16x8xf32>
    %19 = tpu.matmul %5, %18, %cst_18 {dimension_numbers = #tpu.dot_dimension_numbers<[1], [0], [0], [1], [0, 0, 1, 1], [], []>} : vector<16x32xbf16>, vector<32x8xbf16>, vector<16x8xf32> -> vector<16x8xf32>
    %c0_19 = arith.constant 0 : index
    %c0_20 = arith.constant 0 : index
    %c0_21 = arith.constant 0 : index
    %20 = vector.load %arg8[%c0_19, %c0_20, %c0_21] : memref<4x1x8xf32, #tpu.memory_space<vmem>>, vector<1x1x8xf32>
    %21 = vector.shape_cast %20 : vector<1x1x8xf32> to vector<1x8xf32>
    %22 = vector.broadcast %21 : vector<1x8xf32> to vector<16x8xf32>
    %23 = arith.addf %19, %22 : vector<16x8xf32>
    %c0_22 = arith.constant 0 : index
    %c0_23 = arith.constant 0 : index
    %c0_24 = arith.constant 0 : index
    %24 = vector.load %arg9[%c0_22, %c0_23, %c0_24] : memref<4x32x8xbf16, #tpu.memory_space<vmem>>, vector<1x32x8xbf16>
    %25 = vector.shape_cast %24 : vector<1x32x8xbf16> to vector<32x8xbf16>
    %cst_25 = arith.constant dense<0.000000e+00> : vector<16x8xf32>
    %26 = tpu.matmul %8, %25, %cst_25 {dimension_numbers = #tpu.dot_dimension_numbers<[1], [0], [0], [1], [0, 0, 1, 1], [], []>} : vector<16x32xbf16>, vector<32x8xbf16>, vector<16x8xf32> -> vector<16x8xf32>
    %c0_26 = arith.constant 0 : index
    %c0_27 = arith.constant 0 : index
    %c0_28 = arith.constant 0 : index
    %27 = vector.load %arg10[%c0_26, %c0_27, %c0_28] : memref<4x1x8xf32, #tpu.memory_space<vmem>>, vector<1x1x8xf32>
    %28 = vector.shape_cast %27 : vector<1x1x8xf32> to vector<1x8xf32>
    %29 = vector.broadcast %28 : vector<1x8xf32> to vector<16x8xf32>
    %30 = arith.addf %26, %29 : vector<16x8xf32>
    %31 = arith.truncf %16 : vector<8x8xf32> to vector<8x8xbf16>
    %32 = arith.truncf %23 : vector<16x8xf32> to vector<16x8xbf16>
    %cst_29 = arith.constant dense<0.000000e+00> : vector<8x16xf32>
    %33 = tpu.matmul %31, %32, %cst_29 {dimension_numbers = #tpu.dot_dimension_numbers<[1], [1], [0], [0], [0, 0, 1, 0], [], []>} : vector<8x8xbf16>, vector<16x8xbf16>, vector<8x16xf32> -> vector<8x16xf32>
    %cst_30 = arith.constant dense<0xFF800000> : vector<8xf32>
    %34 = vector.multi_reduction <maximumf>, %33, %cst_30 [1] : vector<8x16xf32> to vector<8xf32>
    %35 = vector.shape_cast %34 : vector<8xf32> to vector<8x1xf32>
    %36 = vector.broadcast %35 : vector<8x1xf32> to vector<8x16xf32>
    %37 = arith.subf %33, %36 : vector<8x16xf32>
    %38 = math.exp %37 : vector<8x16xf32>
    %cst_31 = arith.constant dense<0.000000e+00> : vector<8xf32>
    %39 = vector.multi_reduction <add>, %38, %cst_31 [1] : vector<8x16xf32> to vector<8xf32>
    %40 = vector.shape_cast %39 : vector<8xf32> to vector<8x1xf32>
    %41 = tpu.reciprocal %40 {approx = true} : vector<8x1xf32> -> vector<8x1xf32>
    %42 = vector.broadcast %41 : vector<8x1xf32> to vector<8x16xf32>
    %43 = arith.mulf %38, %42 : vector<8x16xf32>
    %44 = arith.truncf %43 : vector<8x16xf32> to vector<8x16xbf16>
    %45 = arith.truncf %30 : vector<16x8xf32> to vector<16x8xbf16>
    %cst_32 = arith.constant dense<0.000000e+00> : vector<8x8xf32>
    %46 = tpu.matmul %44, %45, %cst_32 {dimension_numbers = #tpu.dot_dimension_numbers<[1], [0], [0], [1], [0, 0, 1, 1], [], []>} : vector<8x16xbf16>, vector<16x8xbf16>, vector<8x8xf32> -> vector<8x8xf32>
    %47 = arith.truncf %46 : vector<8x8xf32> to vector<8x8xbf16>
    %c0_33 = arith.constant 0 : index
    %c0_34 = arith.constant 0 : index
    %c0_35 = arith.constant 0 : index
    %48 = vector.load %arg11[%c0_33, %c0_34, %c0_35] : memref<4x8x32xbf16, #tpu.memory_space<vmem>>, vector<1x8x32xbf16>
    %49 = vector.shape_cast %48 : vector<1x8x32xbf16> to vector<8x32xbf16>
    %cst_36 = arith.constant dense<0.000000e+00> : vector<8x32xf32>
    %50 = tpu.matmul %47, %49, %cst_36 {dimension_numbers = #tpu.dot_dimension_numbers<[1], [0], [0], [1], [0, 0, 1, 1], [], []>} : vector<8x8xbf16>, vector<8x32xbf16>, vector<8x32xf32> -> vector<8x32xf32>
    %51 = arith.addf %9, %50 : vector<8x32xf32>
    %c1 = arith.constant 1 : index
    %c0_37 = arith.constant 0 : index
    %c0_38 = arith.constant 0 : index
    %52 = vector.load %arg5[%c1, %c0_37, %c0_38] : memref<4x32x8xbf16, #tpu.memory_space<vmem>>, vector<1x32x8xbf16>
    %53 = vector.shape_cast %52 : vector<1x32x8xbf16> to vector<32x8xbf16>
    %cst_39 = arith.constant dense<0.000000e+00> : vector<8x8xf32>
    %54 = tpu.matmul %2, %53, %cst_39 {dimension_numbers = #tpu.dot_dimension_numbers<[1], [0], [0], [1], [0, 0, 1, 1], [], []>} : vector<8x32xbf16>, vector<32x8xbf16>, vector<8x8xf32> -> vector<8x8xf32>
    %c1_40 = arith.constant 1 : index
    %c0_41 = arith.constant 0 : index
    %c0_42 = arith.constant 0 : index
    %55 = vector.load %arg6[%c1_40, %c0_41, %c0_42] : memref<4x1x8xf32, #tpu.memory_space<vmem>>, vector<1x1x8xf32>
    %56 = vector.shape_cast %55 : vector<1x1x8xf32> to vector<1x8xf32>
    %57 = vector.broadcast %56 : vector<1x8xf32> to vector<8x8xf32>
    %58 = arith.addf %54, %57 : vector<8x8xf32>
    %c1_43 = arith.constant 1 : index
    %c0_44 = arith.constant 0 : index
    %c0_45 = arith.constant 0 : index
    %59 = vector.load %arg7[%c1_43, %c0_44, %c0_45] : memref<4x32x8xbf16, #tpu.memory_space<vmem>>, vector<1x32x8xbf16>
    %60 = vector.shape_cast %59 : vector<1x32x8xbf16> to vector<32x8xbf16>
    %cst_46 = arith.constant dense<0.000000e+00> : vector<16x8xf32>
    %61 = tpu.matmul %5, %60, %cst_46 {dimension_numbers = #tpu.dot_dimension_numbers<[1], [0], [0], [1], [0, 0, 1, 1], [], []>} : vector<16x32xbf16>, vector<32x8xbf16>, vector<16x8xf32> -> vector<16x8xf32>
    %c1_47 = arith.constant 1 : index
    %c0_48 = arith.constant 0 : index
    %c0_49 = arith.constant 0 : index
    %62 = vector.load %arg8[%c1_47, %c0_48, %c0_49] : memref<4x1x8xf32, #tpu.memory_space<vmem>>, vector<1x1x8xf32>
    %63 = vector.shape_cast %62 : vector<1x1x8xf32> to vector<1x8xf32>
    %64 = vector.broadcast %63 : vector<1x8xf32> to vector<16x8xf32>
    %65 = arith.addf %61, %64 : vector<16x8xf32>
    %c1_50 = arith.constant 1 : index
    %c0_51 = arith.constant 0 : index
    %c0_52 = arith.constant 0 : index
    %66 = vector.load %arg9[%c1_50, %c0_51, %c0_52] : memref<4x32x8xbf16, #tpu.memory_space<vmem>>, vector<1x32x8xbf16>
    %67 = vector.shape_cast %66 : vector<1x32x8xbf16> to vector<32x8xbf16>
    %cst_53 = arith.constant dense<0.000000e+00> : vector<16x8xf32>
    %68 = tpu.matmul %8, %67, %cst_53 {dimension_numbers = #tpu.dot_dimension_numbers<[1], [0], [0], [1], [0, 0, 1, 1], [], []>} : vector<16x32xbf16>, vector<32x8xbf16>, vector<16x8xf32> -> vector<16x8xf32>
    %c1_54 = arith.constant 1 : index
    %c0_55 = arith.constant 0 : index
    %c0_56 = arith.constant 0 : index
    %69 = vector.load %arg10[%c1_54, %c0_55, %c0_56] : memref<4x1x8xf32, #tpu.memory_space<vmem>>, vector<1x1x8xf32>
    %70 = vector.shape_cast %69 : vector<1x1x8xf32> to vector<1x8xf32>
    %71 = vector.broadcast %70 : vector<1x8xf32> to vector<16x8xf32>
    %72 = arith.addf %68, %71 : vector<16x8xf32>
    %73 = arith.truncf %58 : vector<8x8xf32> to vector<8x8xbf16>
    %74 = arith.truncf %65 : vector<16x8xf32> to vector<16x8xbf16>
    %cst_57 = arith.constant dense<0.000000e+00> : vector<8x16xf32>
    %75 = tpu.matmul %73, %74, %cst_57 {dimension_numbers = #tpu.dot_dimension_numbers<[1], [1], [0], [0], [0, 0, 1, 0], [], []>} : vector<8x8xbf16>, vector<16x8xbf16>, vector<8x16xf32> -> vector<8x16xf32>
    %cst_58 = arith.constant dense<0xFF800000> : vector<8xf32>
    %76 = vector.multi_reduction <maximumf>, %75, %cst_58 [1] : vector<8x16xf32> to vector<8xf32>
    %77 = vector.shape_cast %76 : vector<8xf32> to vector<8x1xf32>
    %78 = vector.broadcast %77 : vector<8x1xf32> to vector<8x16xf32>
    %79 = arith.subf %75, %78 : vector<8x16xf32>
    %80 = math.exp %79 : vector<8x16xf32>
    %cst_59 = arith.constant dense<0.000000e+00> : vector<8xf32>
    %81 = vector.multi_reduction <add>, %80, %cst_59 [1] : vector<8x16xf32> to vector<8xf32>
    %82 = vector.shape_cast %81 : vector<8xf32> to vector<8x1xf32>
    %83 = tpu.reciprocal %82 {approx = true} : vector<8x1xf32> -> vector<8x1xf32>
    %84 = vector.broadcast %83 : vector<8x1xf32> to vector<8x16xf32>
    %85 = arith.mulf %80, %84 : vector<8x16xf32>
    %86 = arith.truncf %85 : vector<8x16xf32> to vector<8x16xbf16>
    %87 = arith.truncf %72 : vector<16x8xf32> to vector<16x8xbf16>
    %cst_60 = arith.constant dense<0.000000e+00> : vector<8x8xf32>
    %88 = tpu.matmul %86, %87, %cst_60 {dimension_numbers = #tpu.dot_dimension_numbers<[1], [0], [0], [1], [0, 0, 1, 1], [], []>} : vector<8x16xbf16>, vector<16x8xbf16>, vector<8x8xf32> -> vector<8x8xf32>
    %89 = arith.truncf %88 : vector<8x8xf32> to vector<8x8xbf16>
    %c1_61 = arith.constant 1 : index
    %c0_62 = arith.constant 0 : index
    %c0_63 = arith.constant 0 : index
    %90 = vector.load %arg11[%c1_61, %c0_62, %c0_63] : memref<4x8x32xbf16, #tpu.memory_space<vmem>>, vector<1x8x32xbf16>
    %91 = vector.shape_cast %90 : vector<1x8x32xbf16> to vector<8x32xbf16>
    %cst_64 = arith.constant dense<0.000000e+00> : vector<8x32xf32>
    %92 = tpu.matmul %89, %91, %cst_64 {dimension_numbers = #tpu.dot_dimension_numbers<[1], [0], [0], [1], [0, 0, 1, 1], [], []>} : vector<8x8xbf16>, vector<8x32xbf16>, vector<8x32xf32> -> vector<8x32xf32>
    %93 = arith.addf %51, %92 : vector<8x32xf32>
    %c2 = arith.constant 2 : index
    %c0_65 = arith.constant 0 : index
    %c0_66 = arith.constant 0 : index
    %94 = vector.load %arg5[%c2, %c0_65, %c0_66] : memref<4x32x8xbf16, #tpu.memory_space<vmem>>, vector<1x32x8xbf16>
    %95 = vector.shape_cast %94 : vector<1x32x8xbf16> to vector<32x8xbf16>
    %cst_67 = arith.constant dense<0.000000e+00> : vector<8x8xf32>
    %96 = tpu.matmul %2, %95, %cst_67 {dimension_numbers = #tpu.dot_dimension_numbers<[1], [0], [0], [1], [0, 0, 1, 1], [], []>} : vector<8x32xbf16>, vector<32x8xbf16>, vector<8x8xf32> -> vector<8x8xf32>
    %c2_68 = arith.constant 2 : index
    %c0_69 = arith.constant 0 : index
    %c0_70 = arith.constant 0 : index
    %97 = vector.load %arg6[%c2_68, %c0_69, %c0_70] : memref<4x1x8xf32, #tpu.memory_space<vmem>>, vector<1x1x8xf32>
    %98 = vector.shape_cast %97 : vector<1x1x8xf32> to vector<1x8xf32>
    %99 = vector.broadcast %98 : vector<1x8xf32> to vector<8x8xf32>
    %100 = arith.addf %96, %99 : vector<8x8xf32>
    %c2_71 = arith.constant 2 : index
    %c0_72 = arith.constant 0 : index
    %c0_73 = arith.constant 0 : index
    %101 = vector.load %arg7[%c2_71, %c0_72, %c0_73] : memref<4x32x8xbf16, #tpu.memory_space<vmem>>, vector<1x32x8xbf16>
    %102 = vector.shape_cast %101 : vector<1x32x8xbf16> to vector<32x8xbf16>
    %cst_74 = arith.constant dense<0.000000e+00> : vector<16x8xf32>
    %103 = tpu.matmul %5, %102, %cst_74 {dimension_numbers = #tpu.dot_dimension_numbers<[1], [0], [0], [1], [0, 0, 1, 1], [], []>} : vector<16x32xbf16>, vector<32x8xbf16>, vector<16x8xf32> -> vector<16x8xf32>
    %c2_75 = arith.constant 2 : index
    %c0_76 = arith.constant 0 : index
    %c0_77 = arith.constant 0 : index
    %104 = vector.load %arg8[%c2_75, %c0_76, %c0_77] : memref<4x1x8xf32, #tpu.memory_space<vmem>>, vector<1x1x8xf32>
    %105 = vector.shape_cast %104 : vector<1x1x8xf32> to vector<1x8xf32>
    %106 = vector.broadcast %105 : vector<1x8xf32> to vector<16x8xf32>
    %107 = arith.addf %103, %106 : vector<16x8xf32>
    %c2_78 = arith.constant 2 : index
    %c0_79 = arith.constant 0 : index
    %c0_80 = arith.constant 0 : index
    %108 = vector.load %arg9[%c2_78, %c0_79, %c0_80] : memref<4x32x8xbf16, #tpu.memory_space<vmem>>, vector<1x32x8xbf16>
    %109 = vector.shape_cast %108 : vector<1x32x8xbf16> to vector<32x8xbf16>
    %cst_81 = arith.constant dense<0.000000e+00> : vector<16x8xf32>
    %110 = tpu.matmul %8, %109, %cst_81 {dimension_numbers = #tpu.dot_dimension_numbers<[1], [0], [0], [1], [0, 0, 1, 1], [], []>} : vector<16x32xbf16>, vector<32x8xbf16>, vector<16x8xf32> -> vector<16x8xf32>
    %c2_82 = arith.constant 2 : index
    %c0_83 = arith.constant 0 : index
    %c0_84 = arith.constant 0 : index
    %111 = vector.load %arg10[%c2_82, %c0_83, %c0_84] : memref<4x1x8xf32, #tpu.memory_space<vmem>>, vector<1x1x8xf32>
    %112 = vector.shape_cast %111 : vector<1x1x8xf32> to vector<1x8xf32>
    %113 = vector.broadcast %112 : vector<1x8xf32> to vector<16x8xf32>
    %114 = arith.addf %110, %113 : vector<16x8xf32>
    %115 = arith.truncf %100 : vector<8x8xf32> to vector<8x8xbf16>
    %116 = arith.truncf %107 : vector<16x8xf32> to vector<16x8xbf16>
    %cst_85 = arith.constant dense<0.000000e+00> : vector<8x16xf32>
    %117 = tpu.matmul %115, %116, %cst_85 {dimension_numbers = #tpu.dot_dimension_numbers<[1], [1], [0], [0], [0, 0, 1, 0], [], []>} : vector<8x8xbf16>, vector<16x8xbf16>, vector<8x16xf32> -> vector<8x16xf32>
    %cst_86 = arith.constant dense<0xFF800000> : vector<8xf32>
    %118 = vector.multi_reduction <maximumf>, %117, %cst_86 [1] : vector<8x16xf32> to vector<8xf32>
    %119 = vector.shape_cast %118 : vector<8xf32> to vector<8x1xf32>
    %120 = vector.broadcast %119 : vector<8x1xf32> to vector<8x16xf32>
    %121 = arith.subf %117, %120 : vector<8x16xf32>
    %122 = math.exp %121 : vector<8x16xf32>
    %cst_87 = arith.constant dense<0.000000e+00> : vector<8xf32>
    %123 = vector.multi_reduction <add>, %122, %cst_87 [1] : vector<8x16xf32> to vector<8xf32>
    %124 = vector.shape_cast %123 : vector<8xf32> to vector<8x1xf32>
    %125 = tpu.reciprocal %124 {approx = true} : vector<8x1xf32> -> vector<8x1xf32>
    %126 = vector.broadcast %125 : vector<8x1xf32> to vector<8x16xf32>
    %127 = arith.mulf %122, %126 : vector<8x16xf32>
    %128 = arith.truncf %127 : vector<8x16xf32> to vector<8x16xbf16>
    %129 = arith.truncf %114 : vector<16x8xf32> to vector<16x8xbf16>
    %cst_88 = arith.constant dense<0.000000e+00> : vector<8x8xf32>
    %130 = tpu.matmul %128, %129, %cst_88 {dimension_numbers = #tpu.dot_dimension_numbers<[1], [0], [0], [1], [0, 0, 1, 1], [], []>} : vector<8x16xbf16>, vector<16x8xbf16>, vector<8x8xf32> -> vector<8x8xf32>
    %131 = arith.truncf %130 : vector<8x8xf32> to vector<8x8xbf16>
    %c2_89 = arith.constant 2 : index
    %c0_90 = arith.constant 0 : index
    %c0_91 = arith.constant 0 : index
    %132 = vector.load %arg11[%c2_89, %c0_90, %c0_91] : memref<4x8x32xbf16, #tpu.memory_space<vmem>>, vector<1x8x32xbf16>
    %133 = vector.shape_cast %132 : vector<1x8x32xbf16> to vector<8x32xbf16>
    %cst_92 = arith.constant dense<0.000000e+00> : vector<8x32xf32>
    %134 = tpu.matmul %131, %133, %cst_92 {dimension_numbers = #tpu.dot_dimension_numbers<[1], [0], [0], [1], [0, 0, 1, 1], [], []>} : vector<8x8xbf16>, vector<8x32xbf16>, vector<8x32xf32> -> vector<8x32xf32>
    %135 = arith.addf %93, %134 : vector<8x32xf32>
    %c3 = arith.constant 3 : index
    %c0_93 = arith.constant 0 : index
    %c0_94 = arith.constant 0 : index
    %136 = vector.load %arg5[%c3, %c0_93, %c0_94] : memref<4x32x8xbf16, #tpu.memory_space<vmem>>, vector<1x32x8xbf16>
    %137 = vector.shape_cast %136 : vector<1x32x8xbf16> to vector<32x8xbf16>
    %cst_95 = arith.constant dense<0.000000e+00> : vector<8x8xf32>
    %138 = tpu.matmul %2, %137, %cst_95 {dimension_numbers = #tpu.dot_dimension_numbers<[1], [0], [0], [1], [0, 0, 1, 1], [], []>} : vector<8x32xbf16>, vector<32x8xbf16>, vector<8x8xf32> -> vector<8x8xf32>
    %c3_96 = arith.constant 3 : index
    %c0_97 = arith.constant 0 : index
    %c0_98 = arith.constant 0 : index
    %139 = vector.load %arg6[%c3_96, %c0_97, %c0_98] : memref<4x1x8xf32, #tpu.memory_space<vmem>>, vector<1x1x8xf32>
    %140 = vector.shape_cast %139 : vector<1x1x8xf32> to vector<1x8xf32>
    %141 = vector.broadcast %140 : vector<1x8xf32> to vector<8x8xf32>
    %142 = arith.addf %138, %141 : vector<8x8xf32>
    %c3_99 = arith.constant 3 : index
    %c0_100 = arith.constant 0 : index
    %c0_101 = arith.constant 0 : index
    %143 = vector.load %arg7[%c3_99, %c0_100, %c0_101] : memref<4x32x8xbf16, #tpu.memory_space<vmem>>, vector<1x32x8xbf16>
    %144 = vector.shape_cast %143 : vector<1x32x8xbf16> to vector<32x8xbf16>
    %cst_102 = arith.constant dense<0.000000e+00> : vector<16x8xf32>
    %145 = tpu.matmul %5, %144, %cst_102 {dimension_numbers = #tpu.dot_dimension_numbers<[1], [0], [0], [1], [0, 0, 1, 1], [], []>} : vector<16x32xbf16>, vector<32x8xbf16>, vector<16x8xf32> -> vector<16x8xf32>
    %c3_103 = arith.constant 3 : index
    %c0_104 = arith.constant 0 : index
    %c0_105 = arith.constant 0 : index
    %146 = vector.load %arg8[%c3_103, %c0_104, %c0_105] : memref<4x1x8xf32, #tpu.memory_space<vmem>>, vector<1x1x8xf32>
    %147 = vector.shape_cast %146 : vector<1x1x8xf32> to vector<1x8xf32>
    %148 = vector.broadcast %147 : vector<1x8xf32> to vector<16x8xf32>
    %149 = arith.addf %145, %148 : vector<16x8xf32>
    %c3_106 = arith.constant 3 : index
    %c0_107 = arith.constant 0 : index
    %c0_108 = arith.constant 0 : index
    %150 = vector.load %arg9[%c3_106, %c0_107, %c0_108] : memref<4x32x8xbf16, #tpu.memory_space<vmem>>, vector<1x32x8xbf16>
    %151 = vector.shape_cast %150 : vector<1x32x8xbf16> to vector<32x8xbf16>
    %cst_109 = arith.constant dense<0.000000e+00> : vector<16x8xf32>
    %152 = tpu.matmul %8, %151, %cst_109 {dimension_numbers = #tpu.dot_dimension_numbers<[1], [0], [0], [1], [0, 0, 1, 1], [], []>} : vector<16x32xbf16>, vector<32x8xbf16>, vector<16x8xf32> -> vector<16x8xf32>
    %c3_110 = arith.constant 3 : index
    %c0_111 = arith.constant 0 : index
    %c0_112 = arith.constant 0 : index
    %153 = vector.load %arg10[%c3_110, %c0_111, %c0_112] : memref<4x1x8xf32, #tpu.memory_space<vmem>>, vector<1x1x8xf32>
    %154 = vector.shape_cast %153 : vector<1x1x8xf32> to vector<1x8xf32>
    %155 = vector.broadcast %154 : vector<1x8xf32> to vector<16x8xf32>
    %156 = arith.addf %152, %155 : vector<16x8xf32>
    %157 = arith.truncf %142 : vector<8x8xf32> to vector<8x8xbf16>
    %158 = arith.truncf %149 : vector<16x8xf32> to vector<16x8xbf16>
    %cst_113 = arith.constant dense<0.000000e+00> : vector<8x16xf32>
    %159 = tpu.matmul %157, %158, %cst_113 {dimension_numbers = #tpu.dot_dimension_numbers<[1], [1], [0], [0], [0, 0, 1, 0], [], []>} : vector<8x8xbf16>, vector<16x8xbf16>, vector<8x16xf32> -> vector<8x16xf32>
    %cst_114 = arith.constant dense<0xFF800000> : vector<8xf32>
    %160 = vector.multi_reduction <maximumf>, %159, %cst_114 [1] : vector<8x16xf32> to vector<8xf32>
    %161 = vector.shape_cast %160 : vector<8xf32> to vector<8x1xf32>
    %162 = vector.broadcast %161 : vector<8x1xf32> to vector<8x16xf32>
    %163 = arith.subf %159, %162 : vector<8x16xf32>
    %164 = math.exp %163 : vector<8x16xf32>
    %cst_115 = arith.constant dense<0.000000e+00> : vector<8xf32>
    %165 = vector.multi_reduction <add>, %164, %cst_115 [1] : vector<8x16xf32> to vector<8xf32>
    %166 = vector.shape_cast %165 : vector<8xf32> to vector<8x1xf32>
    %167 = tpu.reciprocal %166 {approx = true} : vector<8x1xf32> -> vector<8x1xf32>
    %168 = vector.broadcast %167 : vector<8x1xf32> to vector<8x16xf32>
    %169 = arith.mulf %164, %168 : vector<8x16xf32>
    %170 = arith.truncf %169 : vector<8x16xf32> to vector<8x16xbf16>
    %171 = arith.truncf %156 : vector<16x8xf32> to vector<16x8xbf16>
    %cst_116 = arith.constant dense<0.000000e+00> : vector<8x8xf32>
    %172 = tpu.matmul %170, %171, %cst_116 {dimension_numbers = #tpu.dot_dimension_numbers<[1], [0], [0], [1], [0, 0, 1, 1], [], []>} : vector<8x16xbf16>, vector<16x8xbf16>, vector<8x8xf32> -> vector<8x8xf32>
    %173 = arith.truncf %172 : vector<8x8xf32> to vector<8x8xbf16>
    %c3_117 = arith.constant 3 : index
    %c0_118 = arith.constant 0 : index
    %c0_119 = arith.constant 0 : index
    %174 = vector.load %arg11[%c3_117, %c0_118, %c0_119] : memref<4x8x32xbf16, #tpu.memory_space<vmem>>, vector<1x8x32xbf16>
    %175 = vector.shape_cast %174 : vector<1x8x32xbf16> to vector<8x32xbf16>
    %cst_120 = arith.constant dense<0.000000e+00> : vector<8x32xf32>
    %176 = tpu.matmul %173, %175, %cst_120 {dimension_numbers = #tpu.dot_dimension_numbers<[1], [0], [0], [1], [0, 0, 1, 1], [], []>} : vector<8x8xbf16>, vector<8x32xbf16>, vector<8x32xf32> -> vector<8x32xf32>
    %177 = arith.addf %135, %176 : vector<8x32xf32>
    %c0_121 = arith.constant 0 : index
    %c0_122 = arith.constant 0 : index
    %178 = vector.load %arg12[%c0_121, %c0_122] : memref<1x32xf32, #tpu.memory_space<vmem>>, vector<1x32xf32>
    %179 = vector.broadcast %178 : vector<1x32xf32> to vector<8x32xf32>
    %180 = arith.addf %177, %179 : vector<8x32xf32>
    %c0_123 = arith.constant 0 : index
    %c0_124 = arith.constant 0 : index
    %c0_125 = arith.constant 0 : index
    %181 = vector.load %arg13[%c0_123, %c0_124, %c0_125] : memref<1x8x32xf32, #tpu.memory_space<vmem>>, vector<1x8x32xf32>
    %182 = vector.shape_cast %181 : vector<1x8x32xf32> to vector<8x32xf32>
    %183 = vector.shape_cast %180 : vector<8x32xf32> to vector<1x8x32xf32>
    tpu.vector_store %arg13[%c0_123, %c0_124, %c0_125], %183 {strides = array<i32>} : memref<1x8x32xf32, #tpu.memory_space<vmem>>, vector<1x8x32xf32>,
    return
  }
  func.func @transform_0(%arg0: i32, %arg1: i32) -> (i32, i32, i32) {
    %c0_i32 = arith.constant 0 : i32
    %c0_i32_0 = arith.constant 0 : i32
    return %arg0, %arg1, %c0_i32 : i32, i32, i32
  }
  func.func @transform_1(%arg0: i32, %arg1: i32) -> (i32, i32, i32) {
    %c0_i32 = arith.constant 0 : i32
    %c0_i32_0 = arith.constant 0 : i32
    %c0_i32_1 = arith.constant 0 : i32
    return %arg0, %c0_i32, %c0_i32_0 : i32, i32, i32
  }
  func.func @transform_2(%arg0: i32, %arg1: i32) -> (i32, i32, i32) {
    %c0_i32 = arith.constant 0 : i32
    %c0_i32_0 = arith.constant 0 : i32
    %c0_i32_1 = arith.constant 0 : i32
    return %arg0, %c0_i32, %c0_i32_0 : i32, i32, i32
  }
  func.func @transform_3(%arg0: i32, %arg1: i32) -> (i32, i32, i32) {
    %c0_i32 = arith.constant 0 : i32
    %c0_i32_0 = arith.constant 0 : i32
    %c0_i32_1 = arith.constant 0 : i32
    %c0_i32_2 = arith.constant 0 : i32
    return %c0_i32, %c0_i32_0, %c0_i32_1 : i32, i32, i32
  }
  func.func @transform_4(%arg0: i32, %arg1: i32) -> (i32, i32, i32) {
    %c0_i32 = arith.constant 0 : i32
    %c0_i32_0 = arith.constant 0 : i32
    %c0_i32_1 = arith.constant 0 : i32
    %c0_i32_2 = arith.constant 0 : i32
    return %c0_i32, %c0_i32_0, %c0_i32_1 : i32, i32, i32
  }
  func.func @transform_5(%arg0: i32, %arg1: i32) -> (i32, i32, i32) {
    %c0_i32 = arith.constant 0 : i32
    %c0_i32_0 = arith.constant 0 : i32
    %c0_i32_1 = arith.constant 0 : i32
    %c0_i32_2 = arith.constant 0 : i32
    return %c0_i32, %c0_i32_0, %c0_i32_1 : i32, i32, i32
  }
  func.func @transform_6(%arg0: i32, %arg1: i32) -> (i32, i32, i32) {
    %c0_i32 = arith.constant 0 : i32
    %c0_i32_0 = arith.constant 0 : i32
    %c0_i32_1 = arith.constant 0 : i32
    %c0_i32_2 = arith.constant 0 : i32
    return %c0_i32, %c0_i32_0, %c0_i32_1 : i32, i32, i32
  }
  func.func @transform_7(%arg0: i32, %arg1: i32) -> (i32, i32, i32) {
    %c0_i32 = arith.constant 0 : i32
    %c0_i32_0 = arith.constant 0 : i32
    %c0_i32_1 = arith.constant 0 : i32
    %c0_i32_2 = arith.constant 0 : i32
    return %c0_i32, %c0_i32_0, %c0_i32_1 : i32, i32, i32
  }
  func.func @transform_8(%arg0: i32, %arg1: i32) -> (i32, i32, i32) {
    %c0_i32 = arith.constant 0 : i32
    %c0_i32_0 = arith.constant 0 : i32
    %c0_i32_1 = arith.constant 0 : i32
    %c0_i32_2 = arith.constant 0 : i32
    return %c0_i32, %c0_i32_0, %c0_i32_1 : i32, i32, i32
  }
  func.func @transform_9(%arg0: i32, %arg1: i32) -> (i32, i32, i32) {
    %c0_i32 = arith.constant 0 : i32
    %c0_i32_0 = arith.constant 0 : i32
    %c0_i32_1 = arith.constant 0 : i32
    %c0_i32_2 = arith.constant 0 : i32
    return %c0_i32, %c0_i32_0, %c0_i32_1 : i32, i32, i32
  }
  func.func @transform_10(%arg0: i32, %arg1: i32) -> (i32, i32) {
    %c0_i32 = arith.constant 0 : i32
    %c0_i32_0 = arith.constant 0 : i32
    %c0_i32_1 = arith.constant 0 : i32
    return %c0_i32, %c0_i32_0 : i32, i32
  }
  func.func @transform_11(%arg0: i32, %arg1: i32) -> (i32, i32, i32) {
    %c0_i32 = arith.constant 0 : i32
    %c0_i32_0 = arith.constant 0 : i32
    return %arg0, %arg1, %c0_i32 : i32, i32, i32
  }
}

</mosaic_0001>

<llo_original>
// kernel: tpu_custom_call.1
$region0: #{tpu_custom_call.1}
  #allocation0 [shape = 'u32[]', space=smem, size = 0x4, offset = 0x4, fixed_abs, tag = 'smem constant byte address 0x4 - core index']
  #allocation1 [shape = 'u32[144,128]{1,0:T(1,128)}', space=vmem, size = 0x12000, scoped, tag = 'internal scratch']
  %s0 = inlined_call_operand.vmem [shape: f32[2,16,32], index: 0, kind: input, shape index: {}]
  %s1 = inlined_call_operand.vmem [shape: f32[2,16,32], index: 1, kind: input, shape index: {}]
  %s2 = inlined_call_operand.vmem [shape: f32[2,16,32], index: 2, kind: input, shape index: {}]
  %s3 = inlined_call_operand.vmem [shape: bf16[4,32,8], index: 3, kind: input, shape index: {}]
  %s4 = inlined_call_operand.vmem [shape: f32[4,1,8], index: 4, kind: input, shape index: {}]
  %s5 = inlined_call_operand.vmem [shape: bf16[4,32,8], index: 5, kind: input, shape index: {}]
  %s6 = inlined_call_operand.vmem [shape: f32[4,1,8], index: 6, kind: input, shape index: {}]
  %s7 = inlined_call_operand.vmem [shape: bf16[4,32,8], index: 7, kind: input, shape index: {}]
  %s8 = inlined_call_operand.vmem [shape: f32[4,1,8], index: 8, kind: input, shape index: {}]
  %s9 = inlined_call_operand.vmem [shape: bf16[4,8,32], index: 9, kind: input, shape index: {}]
  %s10 = inlined_call_operand.vmem [shape: f32[1,32], index: 10, kind: input, shape index: {}]
  %s11 = inlined_call_operand.hbm [shape: f32[2,16,32], index: 11, kind: output, shape index: {}]
  %s12 = sld [smem:[#allocation0]]
  $region77: #{tpu_custom_call.1} parent=0
    _
  %s14 = ssub.s32 1, %s12
  %s15 = scalar_select 0, %s14, %s12
  $region1: #{tpu_custom_call.1} parent=0
    #allocation2 [shape = 'u8[8192]{0}', space=vmem, size = 0x2000, scoped, tag = 'output window, operand 0']
    #allocation3 [shape = 's32[2]{0}', space=sflag, size = 0x8, scoped, tag = 'scoped memory for tpu_custom_call.1']
    %16 = vsyncpa [#allocation3], 0
    %s17 = scalar_lea.sflag [#allocation3], 1
    %18 = vsyncpa %s17, 0
    loop: start=0, step=1, limit=6
    $region2: #{tpu_custom_call.1} parent=1 // loop_pre_header
      _
    $region3: #{tpu_custom_call.1} parent=1 // loop_header
      %s20 = sphi 0, %s24
      %p21 = scmp.ge.s32.totalorder %s20, 6
      %s27 = sphi 0, %s39
      %s28 = sphi 0, %s35
      %s29 = sphi 0, %s27
      %s30 = sphi 0, %s28
      %s31 = sphi 0, %s29
      %s32 = sphi 0, %s30
      %s44 = sphi 0, %s46
      %s47 = sphi 0, %s44
      %s48 = sphi 0, %s47
      %s64 = sphi 0, %s48
      %s70 = sphi 0, %s72
      %s73 = sphi 0, %s70
      %s74 = sphi 0, %s73
      %s90 = sphi 0, %s74
      %s96 = sphi 0, %s98
      %s99 = sphi 0, %s96
      %s100 = sphi 0, %s99
      %s116 = sphi 0, %s100
      %s120 = sphi 0, %s120
      %s122 = sphi 0, %s120
      %s123 = sphi 0, %s122
      %s137 = sphi 0, %s123
      %s141 = sphi 0, %s141
      %s143 = sphi 0, %s141
      %s144 = sphi 0, %s143
      %s158 = sphi 0, %s144
      %s162 = sphi 0, %s162
      %s164 = sphi 0, %s162
      %s165 = sphi 0, %s164
      %s179 = sphi 0, %s165
      %s183 = sphi 0, %s183
      %s185 = sphi 0, %s183
      %s186 = sphi 0, %s185
      %s200 = sphi 0, %s186
      %s204 = sphi 0, %s204
      %s206 = sphi 0, %s204
      %s207 = sphi 0, %s206
      %s221 = sphi 0, %s207
      %s225 = sphi 0, %s225
      %s227 = sphi 0, %s225
      %s228 = sphi 0, %s227
      %s242 = sphi 0, %s228
      %s246 = sphi 0, %s246
      %s248 = sphi 0, %s246
      %s249 = sphi 0, %s248
      %s263 = sphi 0, %s249
      %s267 = sphi 0, %s267
      %s269 = sphi 0, %s267
      %s270 = sphi 0, %s269
      %s284 = sphi 0, %s270
      %s292 = sphi 0, %s294
      %s295 = sphi 0, %s292
      %s296 = sphi 0, %s295
      %s312 = sphi 0, %s296
    $region4: #{tpu_custom_call.1} parent=1 // loop_header_branch
      %23 = sbr.rel (%p21) target = $region8
    $region5: #{tpu_custom_call.1} parent=1 // loop_body
      %s25 = ssub.s32 %s20, 1
      %s26 = ssub.s32 %s20, 2
      %s33 = sadd.s32 1, %s28
      %p34 = scmp.ge.s32.totalorder %s33, 2
      %s35 = scalar_select %p34, 0, %s33
      %s36 = sadd.s32 1, %s27
      %s37 = scalar_select %p34, %s36, %s27
      %p38 = scmp.ge.s32.totalorder %s37, 2
      %s39 = scalar_select %p38, 0, %s37
      %s40 = ssub.s32 %s27, %s39
      %s41 = ssub.s32 %s28, %s35
      %s42 = sor.u32 %s40, %s41
      %p43 = scmp.eq.s32.totalorder %s42, 0
      %s45 = sadd.s32 %s44, 1
      %s46 = scalar_select %p43, %s44, %s45
      %p49 = pneg %p43
      %p50 = scmp.eq.s32.totalorder %s20, 3
      %p51 = por %p49, %p50
      %p52 = scmp.ne.s32.totalorder %s44, %s47
      %p53 = scmp.eq.s32.totalorder %s20, 0
      %p54 = por %p52, %p53
      %p55 = scmp.ne.s32.totalorder %s44, %s47
      %p56 = scmp.eq.s32.totalorder %s25, 3
      %p57 = por %p55, %p56
      %p58 = scmp.ne.s32.totalorder %s47, %s48
      %p59 = scmp.eq.s32.totalorder %s25, 0
      %p60 = por %p58, %p59
      %p61 = scmp.ne.s32.totalorder %s47, %s48
      %p62 = scmp.eq.s32.totalorder %s26, 3
      %p63 = por %p61, %p62
      %p65 = scmp.ne.s32.totalorder %s48, %s64
      %p66 = scmp.eq.s32.totalorder %s26, 0
      %p67 = por %p65, %p66
      %s68 = ssub.s32 %s27, %s39
      %p69 = scmp.eq.s32.totalorder %s68, 0
      %s71 = sadd.s32 %s70, 1
      %s72 = scalar_select %p69, %s70, %s71
      %p75 = pneg %p69
      %p76 = scmp.eq.s32.totalorder %s20, 3
      %p77 = por %p75, %p76
      %p78 = scmp.ne.s32.totalorder %s70, %s73
      %p79 = scmp.eq.s32.totalorder %s20, 0
      %p80 = por %p78, %p79
      %p81 = scmp.ne.s32.totalorder %s70, %s73
      %p82 = scmp.eq.s32.totalorder %s25, 3
      %p83 = por %p81, %p82
      %p84 = scmp.ne.s32.totalorder %s73, %s74
      %p85 = scmp.eq.s32.totalorder %s25, 0
      %p86 = por %p84, %p85
      %p87 = scmp.ne.s32.totalorder %s73, %s74
      %p88 = scmp.eq.s32.totalorder %s26, 3
      %p89 = por %p87, %p88
      %p91 = scmp.ne.s32.totalorder %s74, %s90
      %p92 = scmp.eq.s32.totalorder %s26, 0
      %p93 = por %p91, %p92
      %s94 = ssub.s32 %s27, %s39
      %p95 = scmp.eq.s32.totalorder %s94, 0
      %s97 = sadd.s32 %s96, 1
      %s98 = scalar_select %p95, %s96, %s97
      %p101 = pneg %p95
      %p102 = scmp.eq.s32.totalorder %s20, 3
      %p103 = por %p101, %p102
      %p104 = scmp.ne.s32.totalorder %s96, %s99
      %p105 = scmp.eq.s32.totalorder %s20, 0
      %p106 = por %p104, %p105
      %p107 = scmp.ne.s32.totalorder %s96, %s99
      %p108 = scmp.eq.s32.totalorder %s25, 3
      %p109 = por %p107, %p108
      %p110 = scmp.ne.s32.totalorder %s99, %s100
      %p111 = scmp.eq.s32.totalorder %s25, 0
      %p112 = por %p110, %p111
      %p113 = scmp.ne.s32.totalorder %s99, %s100
      %p114 = scmp.eq.s32.totalorder %s26, 3
      %p115 = por %p113, %p114
      %p117 = scmp.ne.s32.totalorder %s100, %s116
      %p118 = scmp.eq.s32.totalorder %s26, 0
      %p119 = por %p117, %p118
      %s121 = sadd.s32 %s120, 1
      %p124 = scmp.eq.s32.totalorder %s20, 3
      %p125 = scmp.ne.s32.totalorder %s120, %s122
      %p126 = scmp.eq.s32.totalorder %s20, 0
      %p127 = por %p125, %p126
      %p128 = scmp.ne.s32.totalorder %s120, %s122
      %p129 = scmp.eq.s32.totalorder %s25, 3
      %p130 = por %p128, %p129
      %p131 = scmp.ne.s32.totalorder %s122, %s123
      %p132 = scmp.eq.s32.totalorder %s25, 0
      %p133 = por %p131, %p132
      %p134 = scmp.ne.s32.totalorder %s122, %s123
      %p135 = scmp.eq.s32.totalorder %s26, 3
      %p136 = por %p134, %p135
      %p138 = scmp.ne.s32.totalorder %s123, %s137
      %p139 = scmp.eq.s32.totalorder %s26, 0
      %p140 = por %p138, %p139
      %s142 = sadd.s32 %s141, 1
      %p145 = scmp.eq.s32.totalorder %s20, 3
      %p146 = scmp.ne.s32.totalorder %s141, %s143
      %p147 = scmp.eq.s32.totalorder %s20, 0
      %p148 = por %p146, %p147
      %p149 = scmp.ne.s32.totalorder %s141, %s143
      %p150 = scmp.eq.s32.totalorder %s25, 3
      %p151 = por %p149, %p150
      %p152 = scmp.ne.s32.totalorder %s143, %s144
      %p153 = scmp.eq.s32.totalorder %s25, 0
      %p154 = por %p152, %p153
      %p155 = scmp.ne.s32.totalorder %s143, %s144
      %p156 = scmp.eq.s32.totalorder %s26, 3
      %p157 = por %p155, %p156
      %p159 = scmp.ne.s32.totalorder %s144, %s158
      %p160 = scmp.eq.s32.totalorder %s26, 0
      %p161 = por %p159, %p160
      %s163 = sadd.s32 %s162, 1
      %p166 = scmp.eq.s32.totalorder %s20, 3
      %p167 = scmp.ne.s32.totalorder %s162, %s164
      %p168 = scmp.eq.s32.totalorder %s20, 0
      %p169 = por %p167, %p168
      %p170 = scmp.ne.s32.totalorder %s162, %s164
      %p171 = scmp.eq.s32.totalorder %s25, 3
      %p172 = por %p170, %p171
      %p173 = scmp.ne.s32.totalorder %s164, %s165
      %p174 = scmp.eq.s32.totalorder %s25, 0
      %p175 = por %p173, %p174
      %p176 = scmp.ne.s32.totalorder %s164, %s165
      %p177 = scmp.eq.s32.totalorder %s26, 3
      %p178 = por %p176, %p177
      %p180 = scmp.ne.s32.totalorder %s165, %s179
      %p181 = scmp.eq.s32.totalorder %s26, 0
      %p182 = por %p180, %p181
      %s184 = sadd.s32 %s183, 1
      %p187 = scmp.eq.s32.totalorder %s20, 3
      %p188 = scmp.ne.s32.totalorder %s183, %s185
      %p189 = scmp.eq.s32.totalorder %s20, 0
      %p190 = por %p188, %p189
      %p191 = scmp.ne.s32.totalorder %s183, %s185
      %p192 = scmp.eq.s32.totalorder %s25, 3
      %p193 = por %p191, %p192
      %p194 = scmp.ne.s32.totalorder %s185, %s186
      %p195 = scmp.eq.s32.totalorder %s25, 0
      %p196 = por %p194, %p195
      %p197 = scmp.ne.s32.totalorder %s185, %s186
      %p198 = scmp.eq.s32.totalorder %s26, 3
      %p199 = por %p197, %p198
      %p201 = scmp.ne.s32.totalorder %s186, %s200
      %p202 = scmp.eq.s32.totalorder %s26, 0
      %p203 = por %p201, %p202
      %s205 = sadd.s32 %s204, 1
      %p208 = scmp.eq.s32.totalorder %s20, 3
      %p209 = scmp.ne.s32.totalorder %s204, %s206
      %p210 = scmp.eq.s32.totalorder %s20, 0
      %p211 = por %p209, %p210
      %p212 = scmp.ne.s32.totalorder %s204, %s206
      %p213 = scmp.eq.s32.totalorder %s25, 3
      %p214 = por %p212, %p213
      %p215 = scmp.ne.s32.totalorder %s206, %s207
      %p216 = scmp.eq.s32.totalorder %s25, 0
      %p217 = por %p215, %p216
      %p218 = scmp.ne.s32.totalorder %s206, %s207
      %p219 = scmp.eq.s32.totalorder %s26, 3
      %p220 = por %p218, %p219
      %p222 = scmp.ne.s32.totalorder %s207, %s221
      %p223 = scmp.eq.s32.totalorder %s26, 0
      %p224 = por %p222, %p223
      %s226 = sadd.s32 %s225, 1
      %p229 = scmp.eq.s32.totalorder %s20, 3
      %p230 = scmp.ne.s32.totalorder %s225, %s227
      %p231 = scmp.eq.s32.totalorder %s20, 0
      %p232 = por %p230, %p231
      %p233 = scmp.ne.s32.totalorder %s225, %s227
      %p234 = scmp.eq.s32.totalorder %s25, 3
      %p235 = por %p233, %p234
      %p236 = scmp.ne.s32.totalorder %s227, %s228
      %p237 = scmp.eq.s32.totalorder %s25, 0
      %p238 = por %p236, %p237
      %p239 = scmp.ne.s32.totalorder %s227, %s228
      %p240 = scmp.eq.s32.totalorder %s26, 3
      %p241 = por %p239, %p240
      %p243 = scmp.ne.s32.totalorder %s228, %s242
      %p244 = scmp.eq.s32.totalorder %s26, 0
      %p245 = por %p243, %p244
      %s247 = sadd.s32 %s246, 1
      %p250 = scmp.eq.s32.totalorder %s20, 3
      %p251 = scmp.ne.s32.totalorder %s246, %s248
      %p252 = scmp.eq.s32.totalorder %s20, 0
      %p253 = por %p251, %p252
      %p254 = scmp.ne.s32.totalorder %s246, %s248
      %p255 = scmp.eq.s32.totalorder %s25, 3
      %p256 = por %p254, %p255
      %p257 = scmp.ne.s32.totalorder %s248, %s249
      %p258 = scmp.eq.s32.totalorder %s25, 0
      %p259 = por %p257, %p258
      %p260 = scmp.ne.s32.totalorder %s248, %s249
      %p261 = scmp.eq.s32.totalorder %s26, 3
      %p262 = por %p260, %p261
      %p264 = scmp.ne.s32.totalorder %s249, %s263
      %p265 = scmp.eq.s32.totalorder %s26, 0
      %p266 = por %p264, %p265
      %s268 = sadd.s32 %s267, 1
      %p271 = scmp.eq.s32.totalorder %s20, 3
      %p272 = scmp.ne.s32.totalorder %s267, %s269
      %p273 = scmp.eq.s32.totalorder %s20, 0
      %p274 = por %p272, %p273
      %p275 = scmp.ne.s32.totalorder %s267, %s269
      %p276 = scmp.eq.s32.totalorder %s25, 3
      %p277 = por %p275, %p276
      %p278 = scmp.ne.s32.totalorder %s269, %s270
      %p279 = scmp.eq.s32.totalorder %s25, 0
      %p280 = por %p278, %p279
      %p281 = scmp.ne.s32.totalorder %s269, %s270
      %p282 = scmp.eq.s32.totalorder %s26, 3
      %p283 = por %p281, %p282
      %p285 = scmp.ne.s32.totalorder %s270, %s284
      %p286 = scmp.eq.s32.totalorder %s26, 0
      %p287 = por %p285, %p286
      %s288 = ssub.s32 %s27, %s39
      %s289 = ssub.s32 %s28, %s35
      %s290 = sor.u32 %s288, %s289
      %p291 = scmp.eq.s32.totalorder %s290, 0
      %s293 = sadd.s32 %s292, 1
      %s294 = scalar_select %p291, %s292, %s293
      %p297 = pneg %p291
      %p298 = scmp.eq.s32.totalorder %s20, 3
      %p299 = por %p297, %p298
      %p300 = scmp.ne.s32.totalorder %s292, %s295
      %p301 = scmp.eq.s32.totalorder %s20, 0
      %p302 = por %p300, %p301
      %p303 = scmp.ne.s32.totalorder %s292, %s295
      %p304 = scmp.eq.s32.totalorder %s25, 3
      %p305 = por %p303, %p304
      %p306 = scmp.ne.s32.totalorder %s295, %s296
      %p307 = scmp.eq.s32.totalorder %s25, 0
      %p308 = por %p306, %p307
      %p309 = scmp.ne.s32.totalorder %s295, %s296
      %p310 = scmp.eq.s32.totalorder %s26, 3
      %p311 = por %p309, %p310
      %p313 = scmp.ne.s32.totalorder %s296, %s312
      %p314 = scmp.eq.s32.totalorder %s26, 0
      %p315 = por %p313, %p314
      %p316 = scmp.le.s32.totalorder 1, %s20
      %p317 = scmp.lt.s32.totalorder %s20, 5
      %p318 = pnand %p316, %p317
      %p319 = pneg %p318
      // Predicated region
      $region9: #{tpu_custom_call.1} parent=5 // pred_check
        _
      $region10: #{tpu_custom_call.1} parent=5 // pred_check_branch
        %321 = sbr.rel (%p318) target = $region12
      $region11: #{tpu_custom_call.1} parent=5 // pred_region
        %s322 = ssub.s32 %s20, 1
        // Predicated region
        $region13: #{tpu_custom_call.1} parent=11 // pred_check
          %p323 = pneg %p133
        $region14: #{tpu_custom_call.1} parent=11 // pred_check_branch
          %325 = sbr.rel (%p323) target = $region16
        $region15: #{tpu_custom_call.1} parent=11 // pred_region
          _
        $region16: #{tpu_custom_call.1} parent=11 // pred_fallthru
          _
        // Predicated region
        $region17: #{tpu_custom_call.1} parent=11 // pred_check
          %p326 = pneg %p154
        $region18: #{tpu_custom_call.1} parent=11 // pred_check_branch
          %328 = sbr.rel (%p326) target = $region20
        $region19: #{tpu_custom_call.1} parent=11 // pred_region
          _
        $region20: #{tpu_custom_call.1} parent=11 // pred_fallthru
          _
        // Predicated region
        $region21: #{tpu_custom_call.1} parent=11 // pred_check
          %p329 = pneg %p175
        $region22: #{tpu_custom_call.1} parent=11 // pred_check_branch
          %331 = sbr.rel (%p329) target = $region24
        $region23: #{tpu_custom_call.1} parent=11 // pred_region
          _
        $region24: #{tpu_custom_call.1} parent=11 // pred_fallthru
          _
        // Predicated region
        $region25: #{tpu_custom_call.1} parent=11 // pred_check
          %p332 = pneg %p196
        $region26: #{tpu_custom_call.1} parent=11 // pred_check_branch
          %334 = sbr.rel (%p332) target = $region28
        $region27: #{tpu_custom_call.1} parent=11 // pred_region
          _
        $region28: #{tpu_custom_call.1} parent=11 // pred_fallthru
          _
        // Predicated region
        $region29: #{tpu_custom_call.1} parent=11 // pred_check
          %p335 = pneg %p217
        $region30: #{tpu_custom_call.1} parent=11 // pred_check_branch
          %337 = sbr.rel (%p335) target = $region32
        $region31: #{tpu_custom_call.1} parent=11 // pred_region
          _
        $region32: #{tpu_custom_call.1} parent=11 // pred_fallthru
          _
        // Predicated region
        $region33: #{tpu_custom_call.1} parent=11 // pred_check
          %p338 = pneg %p238
        $region34: #{tpu_custom_call.1} parent=11 // pred_check_branch
          %340 = sbr.rel (%p338) target = $region36
        $region35: #{tpu_custom_call.1} parent=11 // pred_region
          _
        $region36: #{tpu_custom_call.1} parent=11 // pred_fallthru
          _
        // Predicated region
        $region37: #{tpu_custom_call.1} parent=11 // pred_check
          %p341 = pneg %p259
        $region38: #{tpu_custom_call.1} parent=11 // pred_check_branch
          %343 = sbr.rel (%p341) target = $region40
        $region39: #{tpu_custom_call.1} parent=11 // pred_region
          _
        $region40: #{tpu_custom_call.1} parent=11 // pred_fallthru
          _
        // Predicated region
        $region41: #{tpu_custom_call.1} parent=11 // pred_check
          %p344 = pneg %p280
        $region42: #{tpu_custom_call.1} parent=11 // pred_check_branch
          %346 = sbr.rel (%p344) target = $region44
        $region43: #{tpu_custom_call.1} parent=11 // pred_region
          _
        $region44: #{tpu_custom_call.1} parent=11 // pred_fallthru
          _
      $region12: #{tpu_custom_call.1} parent=5 // pred_fallthru
        _
      %p347 = scmp.lt.s32.totalorder %s20, 4
      // Predicated region
      $region45: #{tpu_custom_call.1} parent=5 // pred_check
        %p348 = pneg %p347
      $region46: #{tpu_custom_call.1} parent=5 // pred_check_branch
        %350 = sbr.rel (%p348) target = $region48
      $region47: #{tpu_custom_call.1} parent=5 // pred_region
        // Predicated region
        $region49: #{tpu_custom_call.1} parent=47 // pred_check
          %p351 = pneg %p54
        $region50: #{tpu_custom_call.1} parent=47 // pred_check_branch
          %353 = sbr.rel (%p351) target = $region52
        $region51: #{tpu_custom_call.1} parent=47 // pred_region
          %p354 = scmp.lt.s32.totalorder %s27, 1
          %s355 = scalar_select %p354, %s27, 1
          %p356 = scmp.lt.s32.totalorder %s28, 1
          %s357 = scalar_select %p356, %s28, 1
          %s358 = smul.addr %s355, 2
          %s359 = sadd.s32 %s357, %s358
          %s360 = smul.addr %s359, 8
          %s361 = scalar_lea.vmem %s0, %s360
        $region52: #{tpu_custom_call.1} parent=47 // pred_fallthru
          _
        // Predicated region
        $region53: #{tpu_custom_call.1} parent=47 // pred_check
          %p362 = pneg %p80
        $region54: #{tpu_custom_call.1} parent=47 // pred_check_branch
          %364 = sbr.rel (%p362) target = $region56
        $region55: #{tpu_custom_call.1} parent=47 // pred_region
          %p365 = scmp.lt.s32.totalorder %s27, 1
          %s366 = scalar_select %p365, %s27, 1
          %s367 = smul.addr %s366, 2
          %s368 = smul.addr %s367, 8
          %s369 = scalar_lea.vmem %s1, %s368
        $region56: #{tpu_custom_call.1} parent=47 // pred_fallthru
          _
        // Predicated region
        $region57: #{tpu_custom_call.1} parent=47 // pred_check
          %p370 = pneg %p106
        $region58: #{tpu_custom_call.1} parent=47 // pred_check_branch
          %372 = sbr.rel (%p370) target = $region60
        $region59: #{tpu_custom_call.1} parent=47 // pred_region
          %p373 = scmp.lt.s32.totalorder %s27, 1
          %s374 = scalar_select %p373, %s27, 1
          %s375 = smul.addr %s374, 2
          %s376 = smul.addr %s375, 8
          %s377 = scalar_lea.vmem %s2, %s376
        $region60: #{tpu_custom_call.1} parent=47 // pred_fallthru
          _
      $region48: #{tpu_custom_call.1} parent=5 // pred_fallthru
        _
      %p378 = scmp.le.s32.totalorder 1, %s20
      %p379 = scmp.lt.s32.totalorder %s20, 5
      %p380 = pnand %p378, %p379
      %p381 = pneg %p380
      // Predicated region
      $region61: #{tpu_custom_call.1} parent=5 // pred_check
        _
      $region62: #{tpu_custom_call.1} parent=5 // pred_check_branch
        %383 = sbr.rel (%p380) target = $region64
      $region63: #{tpu_custom_call.1} parent=5 // pred_region
        %s384 = ssub.s32 %s20, 1
        %p385 = scmp.lt.s32.totalorder %s29, 1
        %s386 = scalar_select %p385, %s29, 1
        %p387 = scmp.lt.s32.totalorder %s30, 1
        %s388 = scalar_select %p387, %s30, 1
        %s389 = smul.addr %s386, 2
        %s390 = sadd.s32 %s388, %s389
        %s391 = smul.addr %s390, 8
        %s392 = scalar_lea.vmem %s0, %s391
        %p393 = pneg %p60
        %p394 = pneg %p57
        %p395 = scmp.lt.s32.totalorder %s29, 1
        %s396 = scalar_select %p395, %s29, 1
        %s397 = smul.addr %s396, 2
        %s398 = smul.addr %s397, 8
        %s399 = scalar_lea.vmem %s1, %s398
        %p400 = pneg %p86
        %p401 = pneg %p83
        %p402 = scmp.lt.s32.totalorder %s29, 1
        %s403 = scalar_select %p402, %s29, 1
        %s404 = smul.addr %s403, 2
        %s405 = smul.addr %s404, 8
        %s406 = scalar_lea.vmem %s2, %s405
        %p407 = pneg %p112
        %p408 = pneg %p109
        %p409 = pneg %p133
        %p410 = pneg %p130
        %p411 = pneg %p154
        %p412 = pneg %p151
        %p413 = pneg %p175
        %p414 = pneg %p172
        %p415 = pneg %p196
        %p416 = pneg %p193
        %p417 = pneg %p217
        %p418 = pneg %p214
        %p419 = pneg %p238
        %p420 = pneg %p235
        %p421 = pneg %p259
        %p422 = pneg %p256
        %p423 = pneg %p280
        %p424 = pneg %p277
        %p425 = pneg %p308
        %p426 = pneg %p305
        %s427 = sand.u32 %s295, 1
        %s428 = scalar_lea.sflag [#allocation3], %s427
        %s429 = sand.u32 %s295, 1
        %s430 = smul.addr %s429, 8
        %s431 = scalar_lea.vmem [#allocation2], %s430
        %p432 = scmp.lt.s32.totalorder %s29, 1
        %s433 = scalar_select %p432, %s29, 1
        %p434 = scmp.lt.s32.totalorder %s30, 1
        %s435 = scalar_select %p434, %s30, 1
        %s436 = smul.addr %s433, 2
        %s437 = sadd.s32 %s435, %s436
        %s438 = smul.addr %s437, 8
        %s439 = scalar_lea.vmem %s0, %s438
        %p440 = scmp.lt.s32.totalorder %s29, 1
        %s441 = scalar_select %p440, %s29, 1
        %s442 = smul.addr %s441, 2
        %s443 = smul.addr %s442, 8
        %s444 = scalar_lea.vmem %s1, %s443
        %p445 = scmp.lt.s32.totalorder %s29, 1
        %s446 = scalar_select %p445, %s29, 1
        %s447 = smul.addr %s446, 2
        %s448 = smul.addr %s447, 8
        %s449 = scalar_lea.vmem %s2, %s448
        %v451 = vld [vmem:[%s439] sm:$0xff]
        %v452 = vpack.c.bf16 %v451, %v451
        %v453 = vld [vmem:[%s444] sm:$0xff]
        %v454 = vld [vmem:[%s444 + $0x8] sm:$0xff]
        %v455 = vpack.c.bf16 %v454, %v453
        %v456 = vld [vmem:[%s449] sm:$0xff]
        %v457 = vld [vmem:[%s449 + $0x8] sm:$0xff]
        %v458 = vpack.c.bf16 %v457, %v456
        %v459 = vld [vmem:[%s3] sm:$0xf]
        %v460 = vld [vmem:[%s3 + $0x4] sm:$0xf]
        %v461 = vld [vmem:[%s3 + $0x8] sm:$0xf]
        %v462 = vld [vmem:[%s3 + $0xc] sm:$0xf]
        %v463 = vld [vmem:[%s4] sm:$0x1]
        %v465 = vlaneseq
        %v466 = vshrl.u32 %v465, 7
        %v467 = vsub.s32 0, %v466
        %v468 = vrot.slane %v463, %v467
        %v474 = vunpack.c.l.b16 %v459
        %v475 = vunpack.c.l.b16 %v460
        %v476 = vunpack.c.l.b16 %v461
        %v477 = vunpack.c.l.b16 %v462
        %v478 = vpack.c.b16 %v475, %v474
        %v479 = vpack.c.b16 %v477, %v476
        %vm482 = vcmask 261120
        %v484 = vsel %vm482, %v452, 0
        %486 = vmatprep.subr.bf16.mxu0 0
        %487 = vmatpush1.bf16.msra.mxu0 0
        %488 = vmatprep.subr.bf16.mxu0 0
        %489 = vmatpush1.bf16.msra.mxu0 0
        %490 = vmatprep.subr.bf16.mxu0 0
        %491 = vmatpush1.bf16.msra.mxu0 0
        %492 = vmatprep.subr.bf16.mxu0 0
        %493 = vmatpush1.bf16.msra.mxu0 0
        %494 = vmatprep.subr.bf16.mxu0 0
        %495 = vmatpush1.bf16.msra.mxu0 0
        %496 = vmatprep.subr.bf16.mxu0 0
        %497 = vmatpush1.bf16.msra.mxu0 0
        %498 = vmatprep.subr.bf16.mxu0 0
        %499 = vmatpush1.bf16.msra.mxu0 %v479
        %500 = vmatprep.subr.bf16.mxu0 0
        %501 = vmatpush1.bf16.msra.mxu0 %v478
        %502 = vmatprep.subr.bf16.mxu0 0
        %503 = vmatpush2.bf16.msra.mxu0 0
        %504 = vmatprep.subr.bf16.mxu0 0
        %505 = vmatpush2.bf16.msra.mxu0 0
        %506 = vmatprep.subr.bf16.mxu0 0
        %507 = vmatpush2.bf16.msra.mxu0 0
        %508 = vmatprep.subr.bf16.mxu0 0
        %509 = vmatpush2.bf16.msra.mxu0 0
        %510 = vmatprep.subr.bf16.mxu0 0
        %511 = vmatpush2.bf16.msra.mxu0 0
        %512 = vmatprep.subr.bf16.mxu0 0
        %513 = vmatpush2.bf16.msra.mxu0 0
        %514 = vmatprep.subr.bf16.mxu0 0
        %515 = vmatpush2.bf16.msra.mxu0 0
        %516 = vmatprep.subr.bf16.mxu0 0
        %517 = vmatpush2.bf16.msra.mxu0 0
        %518 = vmatprep.mubr.bf16.mxu0 0
        %519 = vmatmul.mubr.bf16.gmra.mxu0 %v484
        %v520 = vpop.f32.mrf.mxu0
        %v521 = vadd.f32 %v468, %v520
        %v522 = vpop.f32.mrf.mxu0
        %v523 = vpop.f32.mrf.mxu0
        %v524 = vpop.f32.mrf.mxu0
        %525 = vdwg.mxu0
        %v526 = vld [vmem:[%s5] sm:$0xf]
        %v527 = vld [vmem:[%s5 + $0x4] sm:$0xf]
        %v528 = vld [vmem:[%s5 + $0x8] sm:$0xf]
        %v529 = vld [vmem:[%s5 + $0xc] sm:$0xf]
        %v530 = vld [vmem:[%s6] sm:$0x1]
        %v532 = vlaneseq
        %v533 = vshrl.u32 %v532, 7
        %v534 = vsub.s32 0, %v533
        %v535 = vrot.slane %v530, %v534
        %v541 = vunpack.c.l.b16 %v526
        %v542 = vunpack.c.l.b16 %v527
        %v543 = vunpack.c.l.b16 %v528
        %v544 = vunpack.c.l.b16 %v529
        %v545 = vpack.c.b16 %v542, %v541
        %v546 = vpack.c.b16 %v544, %v543
        %v550 = vsel %vm482, %v455, 0
        %552 = vmatprep.subr.bf16.mxu0 0
        %553 = vmatpush1.bf16.msra.mxu0 0
        %554 = vmatprep.subr.bf16.mxu0 0
        %555 = vmatpush1.bf16.msra.mxu0 0
        %556 = vmatprep.subr.bf16.mxu0 0
        %557 = vmatpush1.bf16.msra.mxu0 0
        %558 = vmatprep.subr.bf16.mxu0 0
        %559 = vmatpush1.bf16.msra.mxu0 0
        %560 = vmatprep.subr.bf16.mxu0 0
        %561 = vmatpush1.bf16.msra.mxu0 0
        %562 = vmatprep.subr.bf16.mxu0 0
        %563 = vmatpush1.bf16.msra.mxu0 0
        %564 = vmatprep.subr.bf16.mxu0 0
        %565 = vmatpush1.bf16.msra.mxu0 %v546
        %566 = vmatprep.subr.bf16.mxu0 0
        %567 = vmatpush1.bf16.msra.mxu0 %v545
        %568 = vmatprep.subr.bf16.mxu0 0
        %569 = vmatpush2.bf16.msra.mxu0 0
        %570 = vmatprep.subr.bf16.mxu0 0
        %571 = vmatpush2.bf16.msra.mxu0 0
        %572 = vmatprep.subr.bf16.mxu0 0
        %573 = vmatpush2.bf16.msra.mxu0 0
        %574 = vmatprep.subr.bf16.mxu0 0
        %575 = vmatpush2.bf16.msra.mxu0 0
        %576 = vmatprep.subr.bf16.mxu0 0
        %577 = vmatpush2.bf16.msra.mxu0 0
        %578 = vmatprep.subr.bf16.mxu0 0
        %579 = vmatpush2.bf16.msra.mxu0 0
        %580 = vmatprep.subr.bf16.mxu0 0
        %581 = vmatpush2.bf16.msra.mxu0 0
        %582 = vmatprep.subr.bf16.mxu0 0
        %583 = vmatpush2.bf16.msra.mxu0 0
        %584 = vmatprep.mubr.bf16.mxu0 0
        %585 = vmatmul.mubr.bf16.gmra.mxu0 %v550
        %v586 = vpop.f32.mrf.mxu0
        %v587 = vadd.f32 %v535, %v586
        %v588 = vpop.f32.mrf.mxu0
        %v589 = vpop.f32.mrf.mxu0
        %v590 = vadd.f32 %v535, %v589
        %v591 = vpop.f32.mrf.mxu0
        %592 = vdwg.mxu0
        %v593 = vld [vmem:[%s7] sm:$0xf]
        %v594 = vld [vmem:[%s7 + $0x4] sm:$0xf]
        %v595 = vld [vmem:[%s7 + $0x8] sm:$0xf]
        %v596 = vld [vmem:[%s7 + $0xc] sm:$0xf]
        %v597 = vld [vmem:[%s8] sm:$0x1]
        %v599 = vlaneseq
        %v600 = vshrl.u32 %v599, 7
        %v601 = vsub.s32 0, %v600
        %v602 = vrot.slane %v597, %v601
        %v608 = vunpack.c.l.b16 %v593
        %v609 = vunpack.c.l.b16 %v594
        %v610 = vunpack.c.l.b16 %v595
        %v611 = vunpack.c.l.b16 %v596
        %v612 = vpack.c.b16 %v609, %v608
        %v613 = vpack.c.b16 %v611, %v610
        %v617 = vsel %vm482, %v458, 0
        %619 = vmatprep.subr.bf16.mxu0 0
        %620 = vmatpush1.bf16.msra.mxu0 0
        %621 = vmatprep.subr.bf16.mxu0 0
        %622 = vmatpush1.bf16.msra.mxu0 0
        %623 = vmatprep.subr.bf16.mxu0 0
        %624 = vmatpush1.bf16.msra.mxu0 0
        %625 = vmatprep.subr.bf16.mxu0 0
        %626 = vmatpush1.bf16.msra.mxu0 0
        %627 = vmatprep.subr.bf16.mxu0 0
        %628 = vmatpush1.bf16.msra.mxu0 0
        %629 = vmatprep.subr.bf16.mxu0 0
        %630 = vmatpush1.bf16.msra.mxu0 0
        %631 = vmatprep.subr.bf16.mxu0 0
        %632 = vmatpush1.bf16.msra.mxu0 %v613
        %633 = vmatprep.subr.bf16.mxu0 0
        %634 = vmatpush1.bf16.msra.mxu0 %v612
        %635 = vmatprep.subr.bf16.mxu0 0
        %636 = vmatpush2.bf16.msra.mxu0 0
        %637 = vmatprep.subr.bf16.mxu0 0
        %638 = vmatpush2.bf16.msra.mxu0 0
        %639 = vmatprep.subr.bf16.mxu0 0
        %640 = vmatpush2.bf16.msra.mxu0 0
        %641 = vmatprep.subr.bf16.mxu0 0
        %642 = vmatpush2.bf16.msra.mxu0 0
        %643 = vmatprep.subr.bf16.mxu0 0
        %644 = vmatpush2.bf16.msra.mxu0 0
        %645 = vmatprep.subr.bf16.mxu0 0
        %646 = vmatpush2.bf16.msra.mxu0 0
        %647 = vmatprep.subr.bf16.mxu0 0
        %648 = vmatpush2.bf16.msra.mxu0 0
        %649 = vmatprep.subr.bf16.mxu0 0
        %650 = vmatpush2.bf16.msra.mxu0 0
        %651 = vmatprep.mubr.bf16.mxu0 0
        %652 = vmatmul.mubr.bf16.gmra.mxu0 %v617
        %v653 = vpop.f32.mrf.mxu0
        %v654 = vadd.f32 %v602, %v653
        %v655 = vpop.f32.mrf.mxu0
        %v656 = vpop.f32.mrf.mxu0
        %v657 = vadd.f32 %v602, %v656
        %v658 = vpop.f32.mrf.mxu0
        %659 = vdwg.mxu0
        %v660 = vpack.c.bf16 %v521, %v521
        %v661 = vpack.c.bf16 %v590, %v587
        %vm662 = vcmask 64512
        %v664 = vsel %vm662, %v660, 0
        %v667 = vsel %vm662, %v661, 0
        %669 = vmatprep.subr.bf16.mxu0 0
        %670 = vmatpush1.bf16.xpose.msra.mxu0 0
        %671 = vmatprep.subr.bf16.mxu0 0
        %672 = vmatpush1.bf16.xpose.msra.mxu0 0
        %673 = vmatprep.subr.bf16.mxu0 0
        %674 = vmatpush1.bf16.xpose.msra.mxu0 0
        %675 = vmatprep.subr.bf16.mxu0 0
        %676 = vmatpush1.bf16.xpose.msra.mxu0 0
        %677 = vmatprep.subr.bf16.mxu0 0
        %678 = vmatpush1.bf16.xpose.msra.mxu0 0
        %679 = vmatprep.subr.bf16.mxu0 0
        %680 = vmatpush1.bf16.xpose.msra.mxu0 0
        %681 = vmatprep.subr.bf16.mxu0 0
        %682 = vmatpush1.bf16.xpose.msra.mxu0 0
        %683 = vmatprep.subr.bf16.mxu0 0
        %684 = vmatpush1.bf16.xpose.msra.mxu0 %v667
        %685 = vmatprep.subr.bf16.mxu0 0
        %686 = vmatpush2.bf16.xpose.msra.mxu0 0
        %687 = vmatprep.subr.bf16.mxu0 0
        %688 = vmatpush2.bf16.xpose.msra.mxu0 0
        %689 = vmatprep.subr.bf16.mxu0 0
        %690 = vmatpush2.bf16.xpose.msra.mxu0 0
        %691 = vmatprep.subr.bf16.mxu0 0
        %692 = vmatpush2.bf16.xpose.msra.mxu0 0
        %693 = vmatprep.subr.bf16.mxu0 0
        %694 = vmatpush2.bf16.xpose.msra.mxu0 0
        %695 = vmatprep.subr.bf16.mxu0 0
        %696 = vmatpush2.bf16.xpose.msra.mxu0 0
        %697 = vmatprep.subr.bf16.mxu0 0
        %698 = vmatpush2.bf16.xpose.msra.mxu0 0
        %699 = vmatprep.subr.bf16.mxu0 0
        %700 = vmatpush2.bf16.xpose.msra.mxu0 0
        %701 = vmatprep.mubr.bf16.mxu0 0
        %702 = vmatmul.mubr.bf16.gmra.mxu0 %v664
        %v703 = vpop.f32.mrf.mxu0
        %v704 = vadd.f32 0.0, %v703
        %v705 = vpop.f32.mrf.mxu0
        %v706 = vpop.f32.mrf.mxu0
        %v707 = vpop.f32.mrf.mxu0
        %708 = vdwg.mxu0
        %vm709 = vcmask 130048
        %v710 = vsel %vm709, %v704, -inf
        %711 = vmax.xlane.f32.xlu0 %v710
        %v712 = vpop.xlane.xlu0 %711
        %v713 = vsub.f32 %v704, %v712
        %v714 = vmul.f32 %v713, 1.442695
        %v715 = vpow.pop %v714
        %v716 = vsel %vm709, %v715, 0.0
        %717 = vadd.xlane.f32.xlu0 %v716
        %v718 = vpop.xlane.xlu0 %717
        %v719 = vrcp.pop %v718
        %v720 = vmul.f32 %v715, %v719
        %v721 = vpack.c.bf16 %v720, %v720
        %v722 = vpack.c.bf16 %v657, %v654
        %v724 = vsel %vm709, %v721, 0
        %726 = vmatprep.subr.bf16.mxu0 0
        %727 = vmatpush1.bf16.msra.mxu0 0
        %728 = vmatprep.subr.bf16.mxu0 0
        %729 = vmatpush1.bf16.msra.mxu0 0
        %730 = vmatprep.subr.bf16.mxu0 0
        %731 = vmatpush1.bf16.msra.mxu0 0
        %732 = vmatprep.subr.bf16.mxu0 0
        %733 = vmatpush1.bf16.msra.mxu0 0
        %734 = vmatprep.subr.bf16.mxu0 0
        %735 = vmatpush1.bf16.msra.mxu0 0
        %736 = vmatprep.subr.bf16.mxu0 0
        %737 = vmatpush1.bf16.msra.mxu0 0
        %738 = vmatprep.subr.bf16.mxu0 0
        %739 = vmatpush1.bf16.msra.mxu0 0
        %740 = vmatprep.subr.bf16.mxu0 0
        %741 = vmatpush1.bf16.msra.mxu0 %v722
        %742 = vmatprep.subr.bf16.mxu0 0
        %743 = vmatpush2.bf16.msra.mxu0 0
        %744 = vmatprep.subr.bf16.mxu0 0
        %745 = vmatpush2.bf16.msra.mxu0 0
        %746 = vmatprep.subr.bf16.mxu0 0
        %747 = vmatpush2.bf16.msra.mxu0 0
        %748 = vmatprep.subr.bf16.mxu0 0
        %749 = vmatpush2.bf16.msra.mxu0 0
        %750 = vmatprep.subr.bf16.mxu0 0
        %751 = vmatpush2.bf16.msra.mxu0 0
        %752 = vmatprep.subr.bf16.mxu0 0
        %753 = vmatpush2.bf16.msra.mxu0 0
        %754 = vmatprep.subr.bf16.mxu0 0
        %755 = vmatpush2.bf16.msra.mxu0 0
        %756 = vmatprep.subr.bf16.mxu0 0
        %757 = vmatpush2.bf16.msra.mxu0 0
        %758 = vmatprep.mubr.bf16.mxu0 0
        %759 = vmatmul.mubr.bf16.gmra.mxu0 %v724
        %v760 = vpop.f32.mrf.mxu0
        %v761 = vadd.f32 0.0, %v760
        %v762 = vpop.f32.mrf.mxu0
        %v763 = vpop.f32.mrf.mxu0
        %v764 = vpop.f32.mrf.mxu0
        %765 = vdwg.mxu0
        %v766 = vpack.c.bf16 %v761, %v761
        %v767 = vld [vmem:[%s9] sm:$0xf]
        %s768 = scalar_lea.vmem %s3, 16
        %v769 = vld [vmem:[%s768] sm:$0xf]
        %v770 = vld [vmem:[%s768 + $0x4] sm:$0xf]
        %v771 = vld [vmem:[%s768 + $0x8] sm:$0xf]
        %v772 = vld [vmem:[%s768 + $0xc] sm:$0xf]
        %s773 = scalar_lea.vmem %s4, 1
        %v774 = vld [vmem:[%s773] sm:$0x1]
        %v776 = vlaneseq
        %v777 = vshrl.u32 %v776, 7
        %v778 = vsub.s32 0, %v777
        %v779 = vrot.slane %v774, %v778
        %v785 = vunpack.c.l.b16 %v769
        %v786 = vunpack.c.l.b16 %v770
        %v787 = vunpack.c.l.b16 %v771
        %v788 = vunpack.c.l.b16 %v772
        %v789 = vpack.c.b16 %v786, %v785
        %v790 = vpack.c.b16 %v788, %v787
        %793 = vmatprep.subr.bf16.mxu0 0
        %794 = vmatpush1.bf16.msra.mxu0 0
        %795 = vmatprep.subr.bf16.mxu0 0
        %796 = vmatpush1.bf16.msra.mxu0 0
        %797 = vmatprep.subr.bf16.mxu0 0
        %798 = vmatpush1.bf16.msra.mxu0 0
        %799 = vmatprep.subr.bf16.mxu0 0
        %800 = vmatpush1.bf16.msra.mxu0 0
        %801 = vmatprep.subr.bf16.mxu0 0
        %802 = vmatpush1.bf16.msra.mxu0 0
        %803 = vmatprep.subr.bf16.mxu0 0
        %804 = vmatpush1.bf16.msra.mxu0 0
        %805 = vmatprep.subr.bf16.mxu0 0
        %806 = vmatpush1.bf16.msra.mxu0 %v790
        %807 = vmatprep.subr.bf16.mxu0 0
        %808 = vmatpush1.bf16.msra.mxu0 %v789
        %809 = vmatprep.subr.bf16.mxu0 0
        %810 = vmatpush2.bf16.msra.mxu0 0
        %811 = vmatprep.subr.bf16.mxu0 0
        %812 = vmatpush2.bf16.msra.mxu0 0
        %813 = vmatprep.subr.bf16.mxu0 0
        %814 = vmatpush2.bf16.msra.mxu0 0
        %815 = vmatprep.subr.bf16.mxu0 0
        %816 = vmatpush2.bf16.msra.mxu0 0
        %817 = vmatprep.subr.bf16.mxu0 0
        %818 = vmatpush2.bf16.msra.mxu0 0
        %819 = vmatprep.subr.bf16.mxu0 0
        %820 = vmatpush2.bf16.msra.mxu0 0
        %821 = vmatprep.subr.bf16.mxu0 0
        %822 = vmatpush2.bf16.msra.mxu0 0
        %823 = vmatprep.subr.bf16.mxu0 0
        %824 = vmatpush2.bf16.msra.mxu0 0
        %825 = vmatprep.mubr.bf16.mxu0 0
        %826 = vmatmul.mubr.bf16.gmra.mxu0 %v484
        %v827 = vpop.f32.mrf.mxu0
        %v828 = vadd.f32 %v779, %v827
        %v829 = vpop.f32.mrf.mxu0
        %v830 = vpop.f32.mrf.mxu0
        %v831 = vpop.f32.mrf.mxu0
        %832 = vdwg.mxu0
        %s833 = scalar_lea.vmem %s5, 16
        %v834 = vld [vmem:[%s833] sm:$0xf]
        %v835 = vld [vmem:[%s833 + $0x4] sm:$0xf]
        %v836 = vld [vmem:[%s833 + $0x8] sm:$0xf]
        %v837 = vld [vmem:[%s833 + $0xc] sm:$0xf]
        %s838 = scalar_lea.vmem %s6, 1
        %v839 = vld [vmem:[%s838] sm:$0x1]
        %v841 = vlaneseq
        %v842 = vshrl.u32 %v841, 7
        %v843 = vsub.s32 0, %v842
        %v844 = vrot.slane %v839, %v843
        %v850 = vunpack.c.l.b16 %v834
        %v851 = vunpack.c.l.b16 %v835
        %v852 = vunpack.c.l.b16 %v836
        %v853 = vunpack.c.l.b16 %v837
        %v854 = vpack.c.b16 %v851, %v850
        %v855 = vpack.c.b16 %v853, %v852
        %858 = vmatprep.subr.bf16.mxu0 0
        %859 = vmatpush1.bf16.msra.mxu0 0
        %860 = vmatprep.subr.bf16.mxu0 0
        %861 = vmatpush1.bf16.msra.mxu0 0
        %862 = vmatprep.subr.bf16.mxu0 0
        %863 = vmatpush1.bf16.msra.mxu0 0
        %864 = vmatprep.subr.bf16.mxu0 0
        %865 = vmatpush1.bf16.msra.mxu0 0
        %866 = vmatprep.subr.bf16.mxu0 0
        %867 = vmatpush1.bf16.msra.mxu0 0
        %868 = vmatprep.subr.bf16.mxu0 0
        %869 = vmatpush1.bf16.msra.mxu0 0
        %870 = vmatprep.subr.bf16.mxu0 0
        %871 = vmatpush1.bf16.msra.mxu0 %v855
        %872 = vmatprep.subr.bf16.mxu0 0
        %873 = vmatpush1.bf16.msra.mxu0 %v854
        %874 = vmatprep.subr.bf16.mxu0 0
        %875 = vmatpush2.bf16.msra.mxu0 0
        %876 = vmatprep.subr.bf16.mxu0 0
        %877 = vmatpush2.bf16.msra.mxu0 0
        %878 = vmatprep.subr.bf16.mxu0 0
        %879 = vmatpush2.bf16.msra.mxu0 0
        %880 = vmatprep.subr.bf16.mxu0 0
        %881 = vmatpush2.bf16.msra.mxu0 0
        %882 = vmatprep.subr.bf16.mxu0 0
        %883 = vmatpush2.bf16.msra.mxu0 0
        %884 = vmatprep.subr.bf16.mxu0 0
        %885 = vmatpush2.bf16.msra.mxu0 0
        %886 = vmatprep.subr.bf16.mxu0 0
        %887 = vmatpush2.bf16.msra.mxu0 0
        %888 = vmatprep.subr.bf16.mxu0 0
        %889 = vmatpush2.bf16.msra.mxu0 0
        %890 = vmatprep.mubr.bf16.mxu0 0
        %891 = vmatmul.mubr.bf16.gmra.mxu0 %v550
        %v892 = vpop.f32.mrf.mxu0
        %v893 = vadd.f32 %v844, %v892
        %v894 = vpop.f32.mrf.mxu0
        %v895 = vpop.f32.mrf.mxu0
        %v896 = vadd.f32 %v844, %v895
        %v897 = vpop.f32.mrf.mxu0
        %898 = vdwg.mxu0
        %s899 = scalar_lea.vmem %s7, 16
        %v900 = vld [vmem:[%s899] sm:$0xf]
        %v901 = vld [vmem:[%s899 + $0x4] sm:$0xf]
        %v902 = vld [vmem:[%s899 + $0x8] sm:$0xf]
        %v903 = vld [vmem:[%s899 + $0xc] sm:$0xf]
        %s904 = scalar_lea.vmem %s8, 1
        %v905 = vld [vmem:[%s904] sm:$0x1]
        %v907 = vlaneseq
        %v908 = vshrl.u32 %v907, 7
        %v909 = vsub.s32 0, %v908
        %v910 = vrot.slane %v905, %v909
        %v916 = vunpack.c.l.b16 %v900
        %v917 = vunpack.c.l.b16 %v901
        %v918 = vunpack.c.l.b16 %v902
        %v919 = vunpack.c.l.b16 %v903
        %v920 = vpack.c.b16 %v917, %v916
        %v921 = vpack.c.b16 %v919, %v918
        %924 = vmatprep.subr.bf16.mxu0 0
        %925 = vmatpush1.bf16.msra.mxu0 0
        %926 = vmatprep.subr.bf16.mxu0 0
        %927 = vmatpush1.bf16.msra.mxu0 0
        %928 = vmatprep.subr.bf16.mxu0 0
        %929 = vmatpush1.bf16.msra.mxu0 0
        %930 = vmatprep.subr.bf16.mxu0 0
        %931 = vmatpush1.bf16.msra.mxu0 0
        %932 = vmatprep.subr.bf16.mxu0 0
        %933 = vmatpush1.bf16.msra.mxu0 0
        %934 = vmatprep.subr.bf16.mxu0 0
        %935 = vmatpush1.bf16.msra.mxu0 0
        %936 = vmatprep.subr.bf16.mxu0 0
        %937 = vmatpush1.bf16.msra.mxu0 %v921
        %938 = vmatprep.subr.bf16.mxu0 0
        %939 = vmatpush1.bf16.msra.mxu0 %v920
        %940 = vmatprep.subr.bf16.mxu0 0
        %941 = vmatpush2.bf16.msra.mxu0 0
        %942 = vmatprep.subr.bf16.mxu0 0
        %943 = vmatpush2.bf16.msra.mxu0 0
        %944 = vmatprep.subr.bf16.mxu0 0
        %945 = vmatpush2.bf16.msra.mxu0 0
        %946 = vmatprep.subr.bf16.mxu0 0
        %947 = vmatpush2.bf16.msra.mxu0 0
        %948 = vmatprep.subr.bf16.mxu0 0
        %949 = vmatpush2.bf16.msra.mxu0 0
        %950 = vmatprep.subr.bf16.mxu0 0
        %951 = vmatpush2.bf16.msra.mxu0 0
        %952 = vmatprep.subr.bf16.mxu0 0
        %953 = vmatpush2.bf16.msra.mxu0 0
        %954 = vmatprep.subr.bf16.mxu0 0
        %955 = vmatpush2.bf16.msra.mxu0 0
        %956 = vmatprep.mubr.bf16.mxu0 0
        %957 = vmatmul.mubr.bf16.gmra.mxu0 %v617
        %v958 = vpop.f32.mrf.mxu0
        %v959 = vadd.f32 %v910, %v958
        %v960 = vpop.f32.mrf.mxu0
        %v961 = vpop.f32.mrf.mxu0
        %v962 = vadd.f32 %v910, %v961
        %v963 = vpop.f32.mrf.mxu0
        %964 = vdwg.mxu0
        %v965 = vpack.c.bf16 %v828, %v828
        %v966 = vpack.c.bf16 %v896, %v893
        %v968 = vsel %vm662, %v965, 0
        %v971 = vsel %vm662, %v966, 0
        %973 = vmatprep.subr.bf16.mxu0 0
        %974 = vmatpush1.bf16.xpose.msra.mxu0 0
        %975 = vmatprep.subr.bf16.mxu0 0
        %976 = vmatpush1.bf16.xpose.msra.mxu0 0
        %977 = vmatprep.subr.bf16.mxu0 0
        %978 = vmatpush1.bf16.xpose.msra.mxu0 0
        %979 = vmatprep.subr.bf16.mxu0 0
        %980 = vmatpush1.bf16.xpose.msra.mxu0 0
        %981 = vmatprep.subr.bf16.mxu0 0
        %982 = vmatpush1.bf16.xpose.msra.mxu0 0
        %983 = vmatprep.subr.bf16.mxu0 0
        %984 = vmatpush1.bf16.xpose.msra.mxu0 0
        %985 = vmatprep.subr.bf16.mxu0 0
        %986 = vmatpush1.bf16.xpose.msra.mxu0 0
        %987 = vmatprep.subr.bf16.mxu0 0
        %988 = vmatpush1.bf16.xpose.msra.mxu0 %v971
        %989 = vmatprep.subr.bf16.mxu0 0
        %990 = vmatpush2.bf16.xpose.msra.mxu0 0
        %991 = vmatprep.subr.bf16.mxu0 0
        %992 = vmatpush2.bf16.xpose.msra.mxu0 0
        %993 = vmatprep.subr.bf16.mxu0 0
        %994 = vmatpush2.bf16.xpose.msra.mxu0 0
        %995 = vmatprep.subr.bf16.mxu0 0
        %996 = vmatpush2.bf16.xpose.msra.mxu0 0
        %997 = vmatprep.subr.bf16.mxu0 0
        %998 = vmatpush2.bf16.xpose.msra.mxu0 0
        %999 = vmatprep.subr.bf16.mxu0 0
        %1000 = vmatpush2.bf16.xpose.msra.mxu0 0
        %1001 = vmatprep.subr.bf16.mxu0 0
        %1002 = vmatpush2.bf16.xpose.msra.mxu0 0
        %1003 = vmatprep.subr.bf16.mxu0 0
        %1004 = vmatpush2.bf16.xpose.msra.mxu0 0
        %1005 = vmatprep.mubr.bf16.mxu0 0
        %1006 = vmatmul.mubr.bf16.gmra.mxu0 %v968
        %v1007 = vpop.f32.mrf.mxu0
        %v1008 = vadd.f32 0.0, %v1007
        %v1009 = vpop.f32.mrf.mxu0
        %v1010 = vpop.f32.mrf.mxu0
        %v1011 = vpop.f32.mrf.mxu0
        %1012 = vdwg.mxu0
        %v1013 = vsel %vm709, %v1008, -inf
        %1014 = vmax.xlane.f32.xlu0 %v1013
        %v1015 = vpop.xlane.xlu0 %1014
        %v1016 = vsub.f32 %v1008, %v1015
        %v1017 = vmul.f32 %v1016, 1.442695
        %v1018 = vpow.pop %v1017
        %v1019 = vsel %vm709, %v1018, 0.0
        %1020 = vadd.xlane.f32.xlu0 %v1019
        %v1021 = vpop.xlane.xlu0 %1020
        %v1022 = vrcp.pop %v1021
        %v1023 = vmul.f32 %v1018, %v1022
        %v1024 = vpack.c.bf16 %v1023, %v1023
        %v1025 = vpack.c.bf16 %v962, %v959
        %v1027 = vsel %vm709, %v1024, 0
        %1029 = vmatprep.subr.bf16.mxu0 0
        %1030 = vmatpush1.bf16.msra.mxu0 0
        %1031 = vmatprep.subr.bf16.mxu0 0
        %1032 = vmatpush1.bf16.msra.mxu0 0
        %1033 = vmatprep.subr.bf16.mxu0 0
        %1034 = vmatpush1.bf16.msra.mxu0 0
        %1035 = vmatprep.subr.bf16.mxu0 0
        %1036 = vmatpush1.bf16.msra.mxu0 0
        %1037 = vmatprep.subr.bf16.mxu0 0
        %1038 = vmatpush1.bf16.msra.mxu0 0
        %1039 = vmatprep.subr.bf16.mxu0 0
        %1040 = vmatpush1.bf16.msra.mxu0 0
        %1041 = vmatprep.subr.bf16.mxu0 0
        %1042 = vmatpush1.bf16.msra.mxu0 0
        %1043 = vmatprep.subr.bf16.mxu0 0
        %1044 = vmatpush1.bf16.msra.mxu0 %v1025
        %1045 = vmatprep.subr.bf16.mxu0 0
        %1046 = vmatpush2.bf16.msra.mxu0 0
        %1047 = vmatprep.subr.bf16.mxu0 0
        %1048 = vmatpush2.bf16.msra.mxu0 0
        %1049 = vmatprep.subr.bf16.mxu0 0
        %1050 = vmatpush2.bf16.msra.mxu0 0
        %1051 = vmatprep.subr.bf16.mxu0 0
        %1052 = vmatpush2.bf16.msra.mxu0 0
        %1053 = vmatprep.subr.bf16.mxu0 0
        %1054 = vmatpush2.bf16.msra.mxu0 0
        %1055 = vmatprep.subr.bf16.mxu0 0
        %1056 = vmatpush2.bf16.msra.mxu0 0
        %1057 = vmatprep.subr.bf16.mxu0 0
        %1058 = vmatpush2.bf16.msra.mxu0 0
        %1059 = vmatprep.subr.bf16.mxu0 0
        %1060 = vmatpush2.bf16.msra.mxu0 0
        %1061 = vmatprep.mubr.bf16.mxu0 0
        %1062 = vmatmul.mubr.bf16.gmra.mxu0 %v1027
        %v1063 = vpop.f32.mrf.mxu0
        %v1064 = vadd.f32 0.0, %v1063
        %v1065 = vpop.f32.mrf.mxu0
        %v1066 = vpop.f32.mrf.mxu0
        %v1067 = vpop.f32.mrf.mxu0
        %1068 = vdwg.mxu0
        %v1069 = vpack.c.bf16 %v1064, %v1064
        %s1070 = scalar_lea.vmem %s9, 4
        %v1071 = vld [vmem:[%s1070] sm:$0xf]
        %v1073 = vsel %vm662, %v1069, 0
        %vm1075 = vcmask 1043456
        %v1077 = vsel %vm1075, %v1071, 0
        %1079 = vmatprep.subr.bf16.mxu0 0
        %1080 = vmatpush1.bf16.msra.mxu0 0
        %1081 = vmatprep.subr.bf16.mxu0 0
        %1082 = vmatpush1.bf16.msra.mxu0 0
        %1083 = vmatprep.subr.bf16.mxu0 0
        %1084 = vmatpush1.bf16.msra.mxu0 0
        %1085 = vmatprep.subr.bf16.mxu0 0
        %1086 = vmatpush1.bf16.msra.mxu0 0
        %1087 = vmatprep.subr.bf16.mxu0 0
        %1088 = vmatpush1.bf16.msra.mxu0 0
        %1089 = vmatprep.subr.bf16.mxu0 0
        %1090 = vmatpush1.bf16.msra.mxu0 0
        %1091 = vmatprep.subr.bf16.mxu0 0
        %1092 = vmatpush1.bf16.msra.mxu0 0
        %1093 = vmatprep.subr.bf16.mxu0 0
        %1094 = vmatpush1.bf16.msra.mxu0 %v1077
        %1095 = vmatprep.subr.bf16.mxu0 0
        %1096 = vmatpush2.bf16.msra.mxu0 0
        %1097 = vmatprep.subr.bf16.mxu0 0
        %1098 = vmatpush2.bf16.msra.mxu0 0
        %1099 = vmatprep.subr.bf16.mxu0 0
        %1100 = vmatpush2.bf16.msra.mxu0 0
        %1101 = vmatprep.subr.bf16.mxu0 0
        %1102 = vmatpush2.bf16.msra.mxu0 0
        %1103 = vmatprep.subr.bf16.mxu0 0
        %1104 = vmatpush2.bf16.msra.mxu0 0
        %1105 = vmatprep.subr.bf16.mxu0 0
        %1106 = vmatpush2.bf16.msra.mxu0 0
        %1107 = vmatprep.subr.bf16.mxu0 0
        %1108 = vmatpush2.bf16.msra.mxu0 0
        %1109 = vmatprep.subr.bf16.mxu0 0
        %1110 = vmatpush2.bf16.msra.mxu0 0
        %1111 = vmatprep.mubr.bf16.mxu0 0
        %1112 = vmatmul.mubr.bf16.gmra.mxu0 %v1073
        %v1113 = vpop.f32.mrf.mxu0
        %v1114 = vadd.f32 0.0, %v1113
        %v1115 = vpop.f32.mrf.mxu0
        %v1116 = vpop.f32.mrf.mxu0
        %v1117 = vpop.f32.mrf.mxu0
        %1118 = vdwg.mxu0
        %v1120 = vsel %vm662, %v766, 0
        %v1123 = vsel %vm1075, %v767, 0
        %1125 = vmatprep.subr.bf16.mxu0 0
        %1126 = vmatpush1.bf16.msra.mxu0 0
        %1127 = vmatprep.subr.bf16.mxu0 0
        %1128 = vmatpush1.bf16.msra.mxu0 0
        %1129 = vmatprep.subr.bf16.mxu0 0
        %1130 = vmatpush1.bf16.msra.mxu0 0
        %1131 = vmatprep.subr.bf16.mxu0 0
        %1132 = vmatpush1.bf16.msra.mxu0 0
        %1133 = vmatprep.subr.bf16.mxu0 0
        %1134 = vmatpush1.bf16.msra.mxu0 0
        %1135 = vmatprep.subr.bf16.mxu0 0
        %1136 = vmatpush1.bf16.msra.mxu0 0
        %1137 = vmatprep.subr.bf16.mxu0 0
        %1138 = vmatpush1.bf16.msra.mxu0 0
        %1139 = vmatprep.subr.bf16.mxu0 0
        %1140 = vmatpush1.bf16.msra.mxu0 %v1123
        %1141 = vmatprep.subr.bf16.mxu0 0
        %1142 = vmatpush2.bf16.msra.mxu0 0
        %1143 = vmatprep.subr.bf16.mxu0 0
        %1144 = vmatpush2.bf16.msra.mxu0 0
        %1145 = vmatprep.subr.bf16.mxu0 0
        %1146 = vmatpush2.bf16.msra.mxu0 0
        %1147 = vmatprep.subr.bf16.mxu0 0
        %1148 = vmatpush2.bf16.msra.mxu0 0
        %1149 = vmatprep.subr.bf16.mxu0 0
        %1150 = vmatpush2.bf16.msra.mxu0 0
        %1151 = vmatprep.subr.bf16.mxu0 0
        %1152 = vmatpush2.bf16.msra.mxu0 0
        %1153 = vmatprep.subr.bf16.mxu0 0
        %1154 = vmatpush2.bf16.msra.mxu0 0
        %1155 = vmatprep.subr.bf16.mxu0 0
        %1156 = vmatpush2.bf16.msra.mxu0 0
        %1157 = vmatprep.mubr.bf16.mxu0 0
        %1158 = vmatmul.mubr.bf16.gmra.mxu0 %v1120
        %v1159 = vpop.f32.mrf.mxu0
        %v1160 = vadd.f32 %v1114, %v1159
        %v1161 = vpop.f32.mrf.mxu0
        %v1162 = vpop.f32.mrf.mxu0
        %v1163 = vpop.f32.mrf.mxu0
        %1164 = vdwg.mxu0
        %s1165 = scalar_lea.vmem %s3, 32
        %v1166 = vld [vmem:[%s1165] sm:$0xf]
        %v1167 = vld [vmem:[%s1165 + $0x4] sm:$0xf]
        %v1168 = vld [vmem:[%s1165 + $0x8] sm:$0xf]
        %v1169 = vld [vmem:[%s1165 + $0xc] sm:$0xf]
        %s1170 = scalar_lea.vmem %s4, 2
        %v1171 = vld [vmem:[%s1170] sm:$0x1]
        %v1173 = vlaneseq
        %v1174 = vshrl.u32 %v1173, 7
        %v1175 = vsub.s32 0, %v1174
        %v1176 = vrot.slane %v1171, %v1175
        %v1182 = vunpack.c.l.b16 %v1166
        %v1183 = vunpack.c.l.b16 %v1167
        %v1184 = vunpack.c.l.b16 %v1168
        %v1185 = vunpack.c.l.b16 %v1169
        %v1186 = vpack.c.b16 %v1183, %v1182
        %v1187 = vpack.c.b16 %v1185, %v1184
        %1190 = vmatprep.subr.bf16.mxu0 0
        %1191 = vmatpush1.bf16.msra.mxu0 0
        %1192 = vmatprep.subr.bf16.mxu0 0
        %1193 = vmatpush1.bf16.msra.mxu0 0
        %1194 = vmatprep.subr.bf16.mxu0 0
        %1195 = vmatpush1.bf16.msra.mxu0 0
        %1196 = vmatprep.subr.bf16.mxu0 0
        %1197 = vmatpush1.bf16.msra.mxu0 0
        %1198 = vmatprep.subr.bf16.mxu0 0
        %1199 = vmatpush1.bf16.msra.mxu0 0
        %1200 = vmatprep.subr.bf16.mxu0 0
        %1201 = vmatpush1.bf16.msra.mxu0 0
        %1202 = vmatprep.subr.bf16.mxu0 0
        %1203 = vmatpush1.bf16.msra.mxu0 %v1187
        %1204 = vmatprep.subr.bf16.mxu0 0
        %1205 = vmatpush1.bf16.msra.mxu0 %v1186
        %1206 = vmatprep.subr.bf16.mxu0 0
        %1207 = vmatpush2.bf16.msra.mxu0 0
        %1208 = vmatprep.subr.bf16.mxu0 0
        %1209 = vmatpush2.bf16.msra.mxu0 0
        %1210 = vmatprep.subr.bf16.mxu0 0
        %1211 = vmatpush2.bf16.msra.mxu0 0
        %1212 = vmatprep.subr.bf16.mxu0 0
        %1213 = vmatpush2.bf16.msra.mxu0 0
        %1214 = vmatprep.subr.bf16.mxu0 0
        %1215 = vmatpush2.bf16.msra.mxu0 0
        %1216 = vmatprep.subr.bf16.mxu0 0
        %1217 = vmatpush2.bf16.msra.mxu0 0
        %1218 = vmatprep.subr.bf16.mxu0 0
        %1219 = vmatpush2.bf16.msra.mxu0 0
        %1220 = vmatprep.subr.bf16.mxu0 0
        %1221 = vmatpush2.bf16.msra.mxu0 0
        %1222 = vmatprep.mubr.bf16.mxu0 0
        %1223 = vmatmul.mubr.bf16.gmra.mxu0 %v484
        %v1224 = vpop.f32.mrf.mxu0
        %v1225 = vadd.f32 %v1176, %v1224
        %v1226 = vpop.f32.mrf.mxu0
        %v1227 = vpop.f32.mrf.mxu0
        %v1228 = vpop.f32.mrf.mxu0
        %1229 = vdwg.mxu0
        %s1230 = scalar_lea.vmem %s5, 32
        %v1231 = vld [vmem:[%s1230] sm:$0xf]
        %v1232 = vld [vmem:[%s1230 + $0x4] sm:$0xf]
        %v1233 = vld [vmem:[%s1230 + $0x8] sm:$0xf]
        %v1234 = vld [vmem:[%s1230 + $0xc] sm:$0xf]
        %s1235 = scalar_lea.vmem %s6, 2
        %v1236 = vld [vmem:[%s1235] sm:$0x1]
        %v1238 = vlaneseq
        %v1239 = vshrl.u32 %v1238, 7
        %v1240 = vsub.s32 0, %v1239
        %v1241 = vrot.slane %v1236, %v1240
        %v1247 = vunpack.c.l.b16 %v1231
        %v1248 = vunpack.c.l.b16 %v1232
        %v1249 = vunpack.c.l.b16 %v1233
        %v1250 = vunpack.c.l.b16 %v1234
        %v1251 = vpack.c.b16 %v1248, %v1247
        %v1252 = vpack.c.b16 %v1250, %v1249
        %1255 = vmatprep.subr.bf16.mxu0 0
        %1256 = vmatpush1.bf16.msra.mxu0 0
        %1257 = vmatprep.subr.bf16.mxu0 0
        %1258 = vmatpush1.bf16.msra.mxu0 0
        %1259 = vmatprep.subr.bf16.mxu0 0
        %1260 = vmatpush1.bf16.msra.mxu0 0
        %1261 = vmatprep.subr.bf16.mxu0 0
        %1262 = vmatpush1.bf16.msra.mxu0 0
        %1263 = vmatprep.subr.bf16.mxu0 0
        %1264 = vmatpush1.bf16.msra.mxu0 0
        %1265 = vmatprep.subr.bf16.mxu0 0
        %1266 = vmatpush1.bf16.msra.mxu0 0
        %1267 = vmatprep.subr.bf16.mxu0 0
        %1268 = vmatpush1.bf16.msra.mxu0 %v1252
        %1269 = vmatprep.subr.bf16.mxu0 0
        %1270 = vmatpush1.bf16.msra.mxu0 %v1251
        %1271 = vmatprep.subr.bf16.mxu0 0
        %1272 = vmatpush2.bf16.msra.mxu0 0
        %1273 = vmatprep.subr.bf16.mxu0 0
        %1274 = vmatpush2.bf16.msra.mxu0 0
        %1275 = vmatprep.subr.bf16.mxu0 0
        %1276 = vmatpush2.bf16.msra.mxu0 0
        %1277 = vmatprep.subr.bf16.mxu0 0
        %1278 = vmatpush2.bf16.msra.mxu0 0
        %1279 = vmatprep.subr.bf16.mxu0 0
        %1280 = vmatpush2.bf16.msra.mxu0 0
        %1281 = vmatprep.subr.bf16.mxu0 0
        %1282 = vmatpush2.bf16.msra.mxu0 0
        %1283 = vmatprep.subr.bf16.mxu0 0
        %1284 = vmatpush2.bf16.msra.mxu0 0
        %1285 = vmatprep.subr.bf16.mxu0 0
        %1286 = vmatpush2.bf16.msra.mxu0 0
        %1287 = vmatprep.mubr.bf16.mxu0 0
        %1288 = vmatmul.mubr.bf16.gmra.mxu0 %v550
        %v1289 = vpop.f32.mrf.mxu0
        %v1290 = vadd.f32 %v1241, %v1289
        %v1291 = vpop.f32.mrf.mxu0
        %v1292 = vpop.f32.mrf.mxu0
        %v1293 = vadd.f32 %v1241, %v1292
        %v1294 = vpop.f32.mrf.mxu0
        %1295 = vdwg.mxu0
        %s1296 = scalar_lea.vmem %s7, 32
        %v1297 = vld [vmem:[%s1296] sm:$0xf]
        %v1298 = vld [vmem:[%s1296 + $0x4] sm:$0xf]
        %v1299 = vld [vmem:[%s1296 + $0x8] sm:$0xf]
        %v1300 = vld [vmem:[%s1296 + $0xc] sm:$0xf]
        %s1301 = scalar_lea.vmem %s8, 2
        %v1302 = vld [vmem:[%s1301] sm:$0x1]
        %v1304 = vlaneseq
        %v1305 = vshrl.u32 %v1304, 7
        %v1306 = vsub.s32 0, %v1305
        %v1307 = vrot.slane %v1302, %v1306
        %v1313 = vunpack.c.l.b16 %v1297
        %v1314 = vunpack.c.l.b16 %v1298
        %v1315 = vunpack.c.l.b16 %v1299
        %v1316 = vunpack.c.l.b16 %v1300
        %v1317 = vpack.c.b16 %v1314, %v1313
        %v1318 = vpack.c.b16 %v1316, %v1315
        %1321 = vmatprep.subr.bf16.mxu0 0
        %1322 = vmatpush1.bf16.msra.mxu0 0
        %1323 = vmatprep.subr.bf16.mxu0 0
        %1324 = vmatpush1.bf16.msra.mxu0 0
        %1325 = vmatprep.subr.bf16.mxu0 0
        %1326 = vmatpush1.bf16.msra.mxu0 0
        %1327 = vmatprep.subr.bf16.mxu0 0
        %1328 = vmatpush1.bf16.msra.mxu0 0
        %1329 = vmatprep.subr.bf16.mxu0 0
        %1330 = vmatpush1.bf16.msra.mxu0 0
        %1331 = vmatprep.subr.bf16.mxu0 0
        %1332 = vmatpush1.bf16.msra.mxu0 0
        %1333 = vmatprep.subr.bf16.mxu0 0
        %1334 = vmatpush1.bf16.msra.mxu0 %v1318
        %1335 = vmatprep.subr.bf16.mxu0 0
        %1336 = vmatpush1.bf16.msra.mxu0 %v1317
        %1337 = vmatprep.subr.bf16.mxu0 0
        %1338 = vmatpush2.bf16.msra.mxu0 0
        %1339 = vmatprep.subr.bf16.mxu0 0
        %1340 = vmatpush2.bf16.msra.mxu0 0
        %1341 = vmatprep.subr.bf16.mxu0 0
        %1342 = vmatpush2.bf16.msra.mxu0 0
        %1343 = vmatprep.subr.bf16.mxu0 0
        %1344 = vmatpush2.bf16.msra.mxu0 0
        %1345 = vmatprep.subr.bf16.mxu0 0
        %1346 = vmatpush2.bf16.msra.mxu0 0
        %1347 = vmatprep.subr.bf16.mxu0 0
        %1348 = vmatpush2.bf16.msra.mxu0 0
        %1349 = vmatprep.subr.bf16.mxu0 0
        %1350 = vmatpush2.bf16.msra.mxu0 0
        %1351 = vmatprep.subr.bf16.mxu0 0
        %1352 = vmatpush2.bf16.msra.mxu0 0
        %1353 = vmatprep.mubr.bf16.mxu0 0
        %1354 = vmatmul.mubr.bf16.gmra.mxu0 %v617
        %v1355 = vpop.f32.mrf.mxu0
        %v1356 = vadd.f32 %v1307, %v1355
        %v1357 = vpop.f32.mrf.mxu0
        %v1358 = vpop.f32.mrf.mxu0
        %v1359 = vadd.f32 %v1307, %v1358
        %v1360 = vpop.f32.mrf.mxu0
        %1361 = vdwg.mxu0
        %v1362 = vpack.c.bf16 %v1225, %v1225
        %v1363 = vpack.c.bf16 %v1293, %v1290
        %v1365 = vsel %vm662, %v1362, 0
        %v1368 = vsel %vm662, %v1363, 0
        %1370 = vmatprep.subr.bf16.mxu0 0
        %1371 = vmatpush1.bf16.xpose.msra.mxu0 0
        %1372 = vmatprep.subr.bf16.mxu0 0
        %1373 = vmatpush1.bf16.xpose.msra.mxu0 0
        %1374 = vmatprep.subr.bf16.mxu0 0
        %1375 = vmatpush1.bf16.xpose.msra.mxu0 0
        %1376 = vmatprep.subr.bf16.mxu0 0
        %1377 = vmatpush1.bf16.xpose.msra.mxu0 0
        %1378 = vmatprep.subr.bf16.mxu0 0
        %1379 = vmatpush1.bf16.xpose.msra.mxu0 0
        %1380 = vmatprep.subr.bf16.mxu0 0
        %1381 = vmatpush1.bf16.xpose.msra.mxu0 0
        %1382 = vmatprep.subr.bf16.mxu0 0
        %1383 = vmatpush1.bf16.xpose.msra.mxu0 0
        %1384 = vmatprep.subr.bf16.mxu0 0
        %1385 = vmatpush1.bf16.xpose.msra.mxu0 %v1368
        %1386 = vmatprep.subr.bf16.mxu0 0
        %1387 = vmatpush2.bf16.xpose.msra.mxu0 0
        %1388 = vmatprep.subr.bf16.mxu0 0
        %1389 = vmatpush2.bf16.xpose.msra.mxu0 0
        %1390 = vmatprep.subr.bf16.mxu0 0
        %1391 = vmatpush2.bf16.xpose.msra.mxu0 0
        %1392 = vmatprep.subr.bf16.mxu0 0
        %1393 = vmatpush2.bf16.xpose.msra.mxu0 0
        %1394 = vmatprep.subr.bf16.mxu0 0
        %1395 = vmatpush2.bf16.xpose.msra.mxu0 0
        %1396 = vmatprep.subr.bf16.mxu0 0
        %1397 = vmatpush2.bf16.xpose.msra.mxu0 0
        %1398 = vmatprep.subr.bf16.mxu0 0
        %1399 = vmatpush2.bf16.xpose.msra.mxu0 0
        %1400 = vmatprep.subr.bf16.mxu0 0
        %1401 = vmatpush2.bf16.xpose.msra.mxu0 0
        %1402 = vmatprep.mubr.bf16.mxu0 0
        %1403 = vmatmul.mubr.bf16.gmra.mxu0 %v1365
        %v1404 = vpop.f32.mrf.mxu0
        %v1405 = vadd.f32 0.0, %v1404
        %v1406 = vpop.f32.mrf.mxu0
        %v1407 = vpop.f32.mrf.mxu0
        %v1408 = vpop.f32.mrf.mxu0
        %1409 = vdwg.mxu0
        %v1410 = vsel %vm709, %v1405, -inf
        %1411 = vmax.xlane.f32.xlu0 %v1410
        %v1412 = vpop.xlane.xlu0 %1411
        %v1413 = vsub.f32 %v1405, %v1412
        %v1414 = vmul.f32 %v1413, 1.442695
        %v1415 = vpow.pop %v1414
        %v1416 = vsel %vm709, %v1415, 0.0
        %1417 = vadd.xlane.f32.xlu0 %v1416
        %v1418 = vpop.xlane.xlu0 %1417
        %v1419 = vrcp.pop %v1418
        %v1420 = vmul.f32 %v1415, %v1419
        %v1421 = vpack.c.bf16 %v1420, %v1420
        %v1422 = vpack.c.bf16 %v1359, %v1356
        %v1424 = vsel %vm709, %v1421, 0
        %1426 = vmatprep.subr.bf16.mxu0 0
        %1427 = vmatpush1.bf16.msra.mxu0 0
        %1428 = vmatprep.subr.bf16.mxu0 0
        %1429 = vmatpush1.bf16.msra.mxu0 0
        %1430 = vmatprep.subr.bf16.mxu0 0
        %1431 = vmatpush1.bf16.msra.mxu0 0
        %1432 = vmatprep.subr.bf16.mxu0 0
        %1433 = vmatpush1.bf16.msra.mxu0 0
        %1434 = vmatprep.subr.bf16.mxu0 0
        %1435 = vmatpush1.bf16.msra.mxu0 0
        %1436 = vmatprep.subr.bf16.mxu0 0
        %1437 = vmatpush1.bf16.msra.mxu0 0
        %1438 = vmatprep.subr.bf16.mxu0 0
        %1439 = vmatpush1.bf16.msra.mxu0 0
        %1440 = vmatprep.subr.bf16.mxu0 0
        %1441 = vmatpush1.bf16.msra.mxu0 %v1422
        %1442 = vmatprep.subr.bf16.mxu0 0
        %1443 = vmatpush2.bf16.msra.mxu0 0
        %1444 = vmatprep.subr.bf16.mxu0 0
        %1445 = vmatpush2.bf16.msra.mxu0 0
        %1446 = vmatprep.subr.bf16.mxu0 0
        %1447 = vmatpush2.bf16.msra.mxu0 0
        %1448 = vmatprep.subr.bf16.mxu0 0
        %1449 = vmatpush2.bf16.msra.mxu0 0
        %1450 = vmatprep.subr.bf16.mxu0 0
        %1451 = vmatpush2.bf16.msra.mxu0 0
        %1452 = vmatprep.subr.bf16.mxu0 0
        %1453 = vmatpush2.bf16.msra.mxu0 0
        %1454 = vmatprep.subr.bf16.mxu0 0
        %1455 = vmatpush2.bf16.msra.mxu0 0
        %1456 = vmatprep.subr.bf16.mxu0 0
        %1457 = vmatpush2.bf16.msra.mxu0 0
        %1458 = vmatprep.mubr.bf16.mxu0 0
        %1459 = vmatmul.mubr.bf16.gmra.mxu0 %v1424
        %v1460 = vpop.f32.mrf.mxu0
        %v1461 = vadd.f32 0.0, %v1460
        %v1462 = vpop.f32.mrf.mxu0
        %v1463 = vpop.f32.mrf.mxu0
        %v1464 = vpop.f32.mrf.mxu0
        %1465 = vdwg.mxu0
        %v1466 = vpack.c.bf16 %v1461, %v1461
        %s1467 = scalar_lea.vmem %s9, 8
        %v1468 = vld [vmem:[%s1467] sm:$0xf]
        %v1470 = vsel %vm662, %v1466, 0
        %v1473 = vsel %vm1075, %v1468, 0
        %1475 = vmatprep.subr.bf16.mxu0 0
        %1476 = vmatpush1.bf16.msra.mxu0 0
        %1477 = vmatprep.subr.bf16.mxu0 0
        %1478 = vmatpush1.bf16.msra.mxu0 0
        %1479 = vmatprep.subr.bf16.mxu0 0
        %1480 = vmatpush1.bf16.msra.mxu0 0
        %1481 = vmatprep.subr.bf16.mxu0 0
        %1482 = vmatpush1.bf16.msra.mxu0 0
        %1483 = vmatprep.subr.bf16.mxu0 0
        %1484 = vmatpush1.bf16.msra.mxu0 0
        %1485 = vmatprep.subr.bf16.mxu0 0
        %1486 = vmatpush1.bf16.msra.mxu0 0
        %1487 = vmatprep.subr.bf16.mxu0 0
        %1488 = vmatpush1.bf16.msra.mxu0 0
        %1489 = vmatprep.subr.bf16.mxu0 0
        %1490 = vmatpush1.bf16.msra.mxu0 %v1473
        %1491 = vmatprep.subr.bf16.mxu0 0
        %1492 = vmatpush2.bf16.msra.mxu0 0
        %1493 = vmatprep.subr.bf16.mxu0 0
        %1494 = vmatpush2.bf16.msra.mxu0 0
        %1495 = vmatprep.subr.bf16.mxu0 0
        %1496 = vmatpush2.bf16.msra.mxu0 0
        %1497 = vmatprep.subr.bf16.mxu0 0
        %1498 = vmatpush2.bf16.msra.mxu0 0
        %1499 = vmatprep.subr.bf16.mxu0 0
        %1500 = vmatpush2.bf16.msra.mxu0 0
        %1501 = vmatprep.subr.bf16.mxu0 0
        %1502 = vmatpush2.bf16.msra.mxu0 0
        %1503 = vmatprep.subr.bf16.mxu0 0
        %1504 = vmatpush2.bf16.msra.mxu0 0
        %1505 = vmatprep.subr.bf16.mxu0 0
        %1506 = vmatpush2.bf16.msra.mxu0 0
        %1507 = vmatprep.mubr.bf16.mxu0 0
        %1508 = vmatmul.mubr.bf16.gmra.mxu0 %v1470
        %v1509 = vpop.f32.mrf.mxu0
        %v1510 = vadd.f32 0.0, %v1509
        %v1511 = vpop.f32.mrf.mxu0
        %v1512 = vpop.f32.mrf.mxu0
        %v1513 = vpop.f32.mrf.mxu0
        %1514 = vdwg.mxu0
        %v1515 = vadd.f32 %v1160, %v1510
        %s1516 = scalar_lea.vmem %s3, 48
        %v1517 = vld [vmem:[%s1516] sm:$0xf]
        %v1518 = vld [vmem:[%s1516 + $0x4] sm:$0xf]
        %v1519 = vld [vmem:[%s1516 + $0x8] sm:$0xf]
        %v1520 = vld [vmem:[%s1516 + $0xc] sm:$0xf]
        %s1521 = scalar_lea.vmem %s4, 3
        %v1522 = vld [vmem:[%s1521] sm:$0x1]
        %v1524 = vlaneseq
        %v1525 = vshrl.u32 %v1524, 7
        %v1526 = vsub.s32 0, %v1525
        %v1527 = vrot.slane %v1522, %v1526
        %v1533 = vunpack.c.l.b16 %v1517
        %v1534 = vunpack.c.l.b16 %v1518
        %v1535 = vunpack.c.l.b16 %v1519
        %v1536 = vunpack.c.l.b16 %v1520
        %v1537 = vpack.c.b16 %v1534, %v1533
        %v1538 = vpack.c.b16 %v1536, %v1535
        %1541 = vmatprep.subr.bf16.mxu0 0
        %1542 = vmatpush1.bf16.msra.mxu0 0
        %1543 = vmatprep.subr.bf16.mxu0 0
        %1544 = vmatpush1.bf16.msra.mxu0 0
        %1545 = vmatprep.subr.bf16.mxu0 0
        %1546 = vmatpush1.bf16.msra.mxu0 0
        %1547 = vmatprep.subr.bf16.mxu0 0
        %1548 = vmatpush1.bf16.msra.mxu0 0
        %1549 = vmatprep.subr.bf16.mxu0 0
        %1550 = vmatpush1.bf16.msra.mxu0 0
        %1551 = vmatprep.subr.bf16.mxu0 0
        %1552 = vmatpush1.bf16.msra.mxu0 0
        %1553 = vmatprep.subr.bf16.mxu0 0
        %1554 = vmatpush1.bf16.msra.mxu0 %v1538
        %1555 = vmatprep.subr.bf16.mxu0 0
        %1556 = vmatpush1.bf16.msra.mxu0 %v1537
        %1557 = vmatprep.subr.bf16.mxu0 0
        %1558 = vmatpush2.bf16.msra.mxu0 0
        %1559 = vmatprep.subr.bf16.mxu0 0
        %1560 = vmatpush2.bf16.msra.mxu0 0
        %1561 = vmatprep.subr.bf16.mxu0 0
        %1562 = vmatpush2.bf16.msra.mxu0 0
        %1563 = vmatprep.subr.bf16.mxu0 0
        %1564 = vmatpush2.bf16.msra.mxu0 0
        %1565 = vmatprep.subr.bf16.mxu0 0
        %1566 = vmatpush2.bf16.msra.mxu0 0
        %1567 = vmatprep.subr.bf16.mxu0 0
        %1568 = vmatpush2.bf16.msra.mxu0 0
        %1569 = vmatprep.subr.bf16.mxu0 0
        %1570 = vmatpush2.bf16.msra.mxu0 0
        %1571 = vmatprep.subr.bf16.mxu0 0
        %1572 = vmatpush2.bf16.msra.mxu0 0
        %1573 = vmatprep.mubr.bf16.mxu0 0
        %1574 = vmatmul.mubr.bf16.gmra.mxu0 %v484
        %v1575 = vpop.f32.mrf.mxu0
        %v1576 = vadd.f32 %v1527, %v1575
        %v1577 = vpop.f32.mrf.mxu0
        %v1578 = vpop.f32.mrf.mxu0
        %v1579 = vpop.f32.mrf.mxu0
        %1580 = vdwg.mxu0
        %s1581 = scalar_lea.vmem %s5, 48
        %v1582 = vld [vmem:[%s1581] sm:$0xf]
        %v1583 = vld [vmem:[%s1581 + $0x4] sm:$0xf]
        %v1584 = vld [vmem:[%s1581 + $0x8] sm:$0xf]
        %v1585 = vld [vmem:[%s1581 + $0xc] sm:$0xf]
        %s1586 = scalar_lea.vmem %s6, 3
        %v1587 = vld [vmem:[%s1586] sm:$0x1]
        %v1589 = vlaneseq
        %v1590 = vshrl.u32 %v1589, 7
        %v1591 = vsub.s32 0, %v1590
        %v1592 = vrot.slane %v1587, %v1591
        %v1598 = vunpack.c.l.b16 %v1582
        %v1599 = vunpack.c.l.b16 %v1583
        %v1600 = vunpack.c.l.b16 %v1584
        %v1601 = vunpack.c.l.b16 %v1585
        %v1602 = vpack.c.b16 %v1599, %v1598
        %v1603 = vpack.c.b16 %v1601, %v1600
        %1606 = vmatprep.subr.bf16.mxu0 0
        %1607 = vmatpush1.bf16.msra.mxu0 0
        %1608 = vmatprep.subr.bf16.mxu0 0
        %1609 = vmatpush1.bf16.msra.mxu0 0
        %1610 = vmatprep.subr.bf16.mxu0 0
        %1611 = vmatpush1.bf16.msra.mxu0 0
        %1612 = vmatprep.subr.bf16.mxu0 0
        %1613 = vmatpush1.bf16.msra.mxu0 0
        %1614 = vmatprep.subr.bf16.mxu0 0
        %1615 = vmatpush1.bf16.msra.mxu0 0
        %1616 = vmatprep.subr.bf16.mxu0 0
        %1617 = vmatpush1.bf16.msra.mxu0 0
        %1618 = vmatprep.subr.bf16.mxu0 0
        %1619 = vmatpush1.bf16.msra.mxu0 %v1603
        %1620 = vmatprep.subr.bf16.mxu0 0
        %1621 = vmatpush1.bf16.msra.mxu0 %v1602
        %1622 = vmatprep.subr.bf16.mxu0 0
        %1623 = vmatpush2.bf16.msra.mxu0 0
        %1624 = vmatprep.subr.bf16.mxu0 0
        %1625 = vmatpush2.bf16.msra.mxu0 0
        %1626 = vmatprep.subr.bf16.mxu0 0
        %1627 = vmatpush2.bf16.msra.mxu0 0
        %1628 = vmatprep.subr.bf16.mxu0 0
        %1629 = vmatpush2.bf16.msra.mxu0 0
        %1630 = vmatprep.subr.bf16.mxu0 0
        %1631 = vmatpush2.bf16.msra.mxu0 0
        %1632 = vmatprep.subr.bf16.mxu0 0
        %1633 = vmatpush2.bf16.msra.mxu0 0
        %1634 = vmatprep.subr.bf16.mxu0 0
        %1635 = vmatpush2.bf16.msra.mxu0 0
        %1636 = vmatprep.subr.bf16.mxu0 0
        %1637 = vmatpush2.bf16.msra.mxu0 0
        %1638 = vmatprep.mubr.bf16.mxu0 0
        %1639 = vmatmul.mubr.bf16.gmra.mxu0 %v550
        %v1640 = vpop.f32.mrf.mxu0
        %v1641 = vadd.f32 %v1592, %v1640
        %v1642 = vpop.f32.mrf.mxu0
        %v1643 = vpop.f32.mrf.mxu0
        %v1644 = vadd.f32 %v1592, %v1643
        %v1645 = vpop.f32.mrf.mxu0
        %1646 = vdwg.mxu0
        %s1647 = scalar_lea.vmem %s7, 48
        %v1648 = vld [vmem:[%s1647] sm:$0xf]
        %v1649 = vld [vmem:[%s1647 + $0x4] sm:$0xf]
        %v1650 = vld [vmem:[%s1647 + $0x8] sm:$0xf]
        %v1651 = vld [vmem:[%s1647 + $0xc] sm:$0xf]
        %s1652 = scalar_lea.vmem %s8, 3
        %v1653 = vld [vmem:[%s1652] sm:$0x1]
        %v1655 = vlaneseq
        %v1656 = vshrl.u32 %v1655, 7
        %v1657 = vsub.s32 0, %v1656
        %v1658 = vrot.slane %v1653, %v1657
        %v1664 = vunpack.c.l.b16 %v1648
        %v1665 = vunpack.c.l.b16 %v1649
        %v1666 = vunpack.c.l.b16 %v1650
        %v1667 = vunpack.c.l.b16 %v1651
        %v1668 = vpack.c.b16 %v1665, %v1664
        %v1669 = vpack.c.b16 %v1667, %v1666
        %1672 = vmatprep.subr.bf16.mxu0 0
        %1673 = vmatpush1.bf16.msra.mxu0 0
        %1674 = vmatprep.subr.bf16.mxu0 0
        %1675 = vmatpush1.bf16.msra.mxu0 0
        %1676 = vmatprep.subr.bf16.mxu0 0
        %1677 = vmatpush1.bf16.msra.mxu0 0
        %1678 = vmatprep.subr.bf16.mxu0 0
        %1679 = vmatpush1.bf16.msra.mxu0 0
        %1680 = vmatprep.subr.bf16.mxu0 0
        %1681 = vmatpush1.bf16.msra.mxu0 0
        %1682 = vmatprep.subr.bf16.mxu0 0
        %1683 = vmatpush1.bf16.msra.mxu0 0
        %1684 = vmatprep.subr.bf16.mxu0 0
        %1685 = vmatpush1.bf16.msra.mxu0 %v1669
        %1686 = vmatprep.subr.bf16.mxu0 0
        %1687 = vmatpush1.bf16.msra.mxu0 %v1668
        %1688 = vmatprep.subr.bf16.mxu0 0
        %1689 = vmatpush2.bf16.msra.mxu0 0
        %1690 = vmatprep.subr.bf16.mxu0 0
        %1691 = vmatpush2.bf16.msra.mxu0 0
        %1692 = vmatprep.subr.bf16.mxu0 0
        %1693 = vmatpush2.bf16.msra.mxu0 0
        %1694 = vmatprep.subr.bf16.mxu0 0
        %1695 = vmatpush2.bf16.msra.mxu0 0
        %1696 = vmatprep.subr.bf16.mxu0 0
        %1697 = vmatpush2.bf16.msra.mxu0 0
        %1698 = vmatprep.subr.bf16.mxu0 0
        %1699 = vmatpush2.bf16.msra.mxu0 0
        %1700 = vmatprep.subr.bf16.mxu0 0
        %1701 = vmatpush2.bf16.msra.mxu0 0
        %1702 = vmatprep.subr.bf16.mxu0 0
        %1703 = vmatpush2.bf16.msra.mxu0 0
        %1704 = vmatprep.mubr.bf16.mxu0 0
        %1705 = vmatmul.mubr.bf16.gmra.mxu0 %v617
        %v1706 = vpop.f32.mrf.mxu0
        %v1707 = vadd.f32 %v1658, %v1706
        %v1708 = vpop.f32.mrf.mxu0
        %v1709 = vpop.f32.mrf.mxu0
        %v1710 = vadd.f32 %v1658, %v1709
        %v1711 = vpop.f32.mrf.mxu0
        %1712 = vdwg.mxu0
        %v1713 = vpack.c.bf16 %v1576, %v1576
        %v1714 = vpack.c.bf16 %v1644, %v1641
        %v1716 = vsel %vm662, %v1713, 0
        %v1719 = vsel %vm662, %v1714, 0
        %1721 = vmatprep.subr.bf16.mxu0 0
        %1722 = vmatpush1.bf16.xpose.msra.mxu0 0
        %1723 = vmatprep.subr.bf16.mxu0 0
        %1724 = vmatpush1.bf16.xpose.msra.mxu0 0
        %1725 = vmatprep.subr.bf16.mxu0 0
        %1726 = vmatpush1.bf16.xpose.msra.mxu0 0
        %1727 = vmatprep.subr.bf16.mxu0 0
        %1728 = vmatpush1.bf16.xpose.msra.mxu0 0
        %1729 = vmatprep.subr.bf16.mxu0 0
        %1730 = vmatpush1.bf16.xpose.msra.mxu0 0
        %1731 = vmatprep.subr.bf16.mxu0 0
        %1732 = vmatpush1.bf16.xpose.msra.mxu0 0
        %1733 = vmatprep.subr.bf16.mxu0 0
        %1734 = vmatpush1.bf16.xpose.msra.mxu0 0
        %1735 = vmatprep.subr.bf16.mxu0 0
        %1736 = vmatpush1.bf16.xpose.msra.mxu0 %v1719
        %1737 = vmatprep.subr.bf16.mxu0 0
        %1738 = vmatpush2.bf16.xpose.msra.mxu0 0
        %1739 = vmatprep.subr.bf16.mxu0 0
        %1740 = vmatpush2.bf16.xpose.msra.mxu0 0
        %1741 = vmatprep.subr.bf16.mxu0 0
        %1742 = vmatpush2.bf16.xpose.msra.mxu0 0
        %1743 = vmatprep.subr.bf16.mxu0 0
        %1744 = vmatpush2.bf16.xpose.msra.mxu0 0
        %1745 = vmatprep.subr.bf16.mxu0 0
        %1746 = vmatpush2.bf16.xpose.msra.mxu0 0
        %1747 = vmatprep.subr.bf16.mxu0 0
        %1748 = vmatpush2.bf16.xpose.msra.mxu0 0
        %1749 = vmatprep.subr.bf16.mxu0 0
        %1750 = vmatpush2.bf16.xpose.msra.mxu0 0
        %1751 = vmatprep.subr.bf16.mxu0 0
        %1752 = vmatpush2.bf16.xpose.msra.mxu0 0
        %1753 = vmatprep.mubr.bf16.mxu0 0
        %1754 = vmatmul.mubr.bf16.gmra.mxu0 %v1716
        %v1755 = vpop.f32.mrf.mxu0
        %v1756 = vadd.f32 0.0, %v1755
        %v1757 = vpop.f32.mrf.mxu0
        %v1758 = vpop.f32.mrf.mxu0
        %v1759 = vpop.f32.mrf.mxu0
        %1760 = vdwg.mxu0
        %v1761 = vsel %vm709, %v1756, -inf
        %1762 = vmax.xlane.f32.xlu0 %v1761
        %v1763 = vpop.xlane.xlu0 %1762
        %v1764 = vsub.f32 %v1756, %v1763
        %v1765 = vmul.f32 %v1764, 1.442695
        %v1766 = vpow.pop %v1765
        %v1767 = vsel %vm709, %v1766, 0.0
        %1768 = vadd.xlane.f32.xlu0 %v1767
        %v1769 = vpop.xlane.xlu0 %1768
        %v1770 = vrcp.pop %v1769
        %v1771 = vmul.f32 %v1766, %v1770
        %v1772 = vpack.c.bf16 %v1771, %v1771
        %v1773 = vpack.c.bf16 %v1710, %v1707
        %v1775 = vsel %vm709, %v1772, 0
        %1777 = vmatprep.subr.bf16.mxu0 0
        %1778 = vmatpush1.bf16.msra.mxu0 0
        %1779 = vmatprep.subr.bf16.mxu0 0
        %1780 = vmatpush1.bf16.msra.mxu0 0
        %1781 = vmatprep.subr.bf16.mxu0 0
        %1782 = vmatpush1.bf16.msra.mxu0 0
        %1783 = vmatprep.subr.bf16.mxu0 0
        %1784 = vmatpush1.bf16.msra.mxu0 0
        %1785 = vmatprep.subr.bf16.mxu0 0
        %1786 = vmatpush1.bf16.msra.mxu0 0
        %1787 = vmatprep.subr.bf16.mxu0 0
        %1788 = vmatpush1.bf16.msra.mxu0 0
        %1789 = vmatprep.subr.bf16.mxu0 0
        %1790 = vmatpush1.bf16.msra.mxu0 0
        %1791 = vmatprep.subr.bf16.mxu0 0
        %1792 = vmatpush1.bf16.msra.mxu0 %v1773
        %1793 = vmatprep.subr.bf16.mxu0 0
        %1794 = vmatpush2.bf16.msra.mxu0 0
        %1795 = vmatprep.subr.bf16.mxu0 0
        %1796 = vmatpush2.bf16.msra.mxu0 0
        %1797 = vmatprep.subr.bf16.mxu0 0
        %1798 = vmatpush2.bf16.msra.mxu0 0
        %1799 = vmatprep.subr.bf16.mxu0 0
        %1800 = vmatpush2.bf16.msra.mxu0 0
        %1801 = vmatprep.subr.bf16.mxu0 0
        %1802 = vmatpush2.bf16.msra.mxu0 0
        %1803 = vmatprep.subr.bf16.mxu0 0
        %1804 = vmatpush2.bf16.msra.mxu0 0
        %1805 = vmatprep.subr.bf16.mxu0 0
        %1806 = vmatpush2.bf16.msra.mxu0 0
        %1807 = vmatprep.subr.bf16.mxu0 0
        %1808 = vmatpush2.bf16.msra.mxu0 0
        %1809 = vmatprep.mubr.bf16.mxu0 0
        %1810 = vmatmul.mubr.bf16.gmra.mxu0 %v1775
        %v1811 = vpop.f32.mrf.mxu0
        %v1812 = vadd.f32 0.0, %v1811
        %v1813 = vpop.f32.mrf.mxu0
        %v1814 = vpop.f32.mrf.mxu0
        %v1815 = vpop.f32.mrf.mxu0
        %1816 = vdwg.mxu0
        %v1817 = vpack.c.bf16 %v1812, %v1812
        %s1818 = scalar_lea.vmem %s9, 12
        %v1819 = vld [vmem:[%s1818] sm:$0xf]
        %v1821 = vsel %vm662, %v1817, 0
        %v1824 = vsel %vm1075, %v1819, 0
        %1826 = vmatprep.subr.bf16.mxu0 0
        %1827 = vmatpush1.bf16.msra.mxu0 0
        %1828 = vmatprep.subr.bf16.mxu0 0
        %1829 = vmatpush1.bf16.msra.mxu0 0
        %1830 = vmatprep.subr.bf16.mxu0 0
        %1831 = vmatpush1.bf16.msra.mxu0 0
        %1832 = vmatprep.subr.bf16.mxu0 0
        %1833 = vmatpush1.bf16.msra.mxu0 0
        %1834 = vmatprep.subr.bf16.mxu0 0
        %1835 = vmatpush1.bf16.msra.mxu0 0
        %1836 = vmatprep.subr.bf16.mxu0 0
        %1837 = vmatpush1.bf16.msra.mxu0 0
        %1838 = vmatprep.subr.bf16.mxu0 0
        %1839 = vmatpush1.bf16.msra.mxu0 0
        %1840 = vmatprep.subr.bf16.mxu0 0
        %1841 = vmatpush1.bf16.msra.mxu0 %v1824
        %1842 = vmatprep.subr.bf16.mxu0 0
        %1843 = vmatpush2.bf16.msra.mxu0 0
        %1844 = vmatprep.subr.bf16.mxu0 0
        %1845 = vmatpush2.bf16.msra.mxu0 0
        %1846 = vmatprep.subr.bf16.mxu0 0
        %1847 = vmatpush2.bf16.msra.mxu0 0
        %1848 = vmatprep.subr.bf16.mxu0 0
        %1849 = vmatpush2.bf16.msra.mxu0 0
        %1850 = vmatprep.subr.bf16.mxu0 0
        %1851 = vmatpush2.bf16.msra.mxu0 0
        %1852 = vmatprep.subr.bf16.mxu0 0
        %1853 = vmatpush2.bf16.msra.mxu0 0
        %1854 = vmatprep.subr.bf16.mxu0 0
        %1855 = vmatpush2.bf16.msra.mxu0 0
        %1856 = vmatprep.subr.bf16.mxu0 0
        %1857 = vmatpush2.bf16.msra.mxu0 0
        %1858 = vmatprep.mubr.bf16.mxu0 0
        %1859 = vmatmul.mubr.bf16.gmra.mxu0 %v1821
        %v1860 = vpop.f32.mrf.mxu0
        %v1861 = vadd.f32 0.0, %v1860
        %v1862 = vpop.f32.mrf.mxu0
        %v1863 = vpop.f32.mrf.mxu0
        %v1864 = vpop.f32.mrf.mxu0
        %1865 = vdwg.mxu0
        %v1866 = vadd.f32 %v1515, %v1861
        %v1867 = vld [vmem:[%s10] sm:$0x1]
        %v1869 = vlaneseq
        %v1870 = vshrl.u32 %v1869, 7
        %v1871 = vsub.s32 0, %v1870
        %v1872 = vrot.slane %v1867, %v1871
        %v1874 = vadd.f32 %v1866, %v1872
        %1875 = vst.msk [vmem:[%s431] sm:$0xff] %vm482, %v1874
        %s1876 = sand.u32 %s295, 1
        %s1877 = scalar_lea.sflag [#allocation3], %s1876
        %s1878 = sand.u32 %s295, 1
        %s1879 = smul.addr %s1878, 8
        %s1880 = scalar_lea.vmem [#allocation2], %s1879
        // Predicated region
        $region65: #{tpu_custom_call.1} parent=63 // pred_check
          %p1881 = pneg %p305
        $region66: #{tpu_custom_call.1} parent=63 // pred_check_branch
          %1883 = sbr.rel (%p1881) target = $region68
        $region67: #{tpu_custom_call.1} parent=63 // pred_region
          %s1885 = ssub.s32 128, 128
          %1886 = vsyncadd %s1877, %s1885
          %s1887 = smul.addr %s29, 2
          %s1888 = sadd.s32 %s30, %s1887
          %s1889 = smul.addr %s1888, 128
          %s1890 = scalar_lea.hbm %s11, %s1889
          %s1892 = sshll.u32 %s1880, 4
          %s1893 = int_to_ptr.vmem [resolvable:$true] %s1892
          %1895 = dma.vmem_to_hbm [thread:$0]  %s1893, 128, %s1890, %s1877
        $region68: #{tpu_custom_call.1} parent=63 // pred_fallthru
          _
      $region64: #{tpu_custom_call.1} parent=5 // pred_fallthru
        _
      %p1896 = scmp.le.s32.totalorder 2, %s20
      // Predicated region
      $region69: #{tpu_custom_call.1} parent=5 // pred_check
        %p1897 = pneg %p1896
      $region70: #{tpu_custom_call.1} parent=5 // pred_check_branch
        %1899 = sbr.rel (%p1897) target = $region72
      $region71: #{tpu_custom_call.1} parent=5 // pred_region
        %s1900 = ssub.s32 %s20, 2
        // Predicated region
        $region73: #{tpu_custom_call.1} parent=71 // pred_check
          %p1901 = pneg %p311
        $region74: #{tpu_custom_call.1} parent=71 // pred_check_branch
          %1903 = sbr.rel (%p1901) target = $region76
        $region75: #{tpu_custom_call.1} parent=71 // pred_region
          %s1904 = sand.u32 %s296, 1
          %s1905 = scalar_lea.sflag [#allocation3], %s1904
          %s1906 = sand.u32 %s296, 1
          %s1907 = smul.addr %s1906, 8
          %s1908 = scalar_lea.vmem [#allocation2], %s1907
          %1909 = dma.done %s1905, 128
        $region76: #{tpu_custom_call.1} parent=71 // pred_fallthru
          _
      $region72: #{tpu_custom_call.1} parent=5 // pred_fallthru
        _
    $region6: #{tpu_custom_call.1} parent=1 // loop_footer
      %s24 = sadd.s32 1, %s20
    $region7: #{tpu_custom_call.1} parent=1 // loop_footer_branch
      %19 = sbr.rel target = $region3
    $region8: #{tpu_custom_call.1} parent=1 // loop_exit
      _
    %1910 = vsyncpa [#allocation3], 1
    %s1911 = scalar_lea.sflag [#allocation3], 1
    %1912 = vsyncpa %s1911, 1

</llo_original>
